<compile_context>
chip_gen: v7x
topology: tpu7x:2x2x1
jax: 0.10.0
libtpu: 0.0.40
codegen_flags: <defaults>
</compile_context>

<pallas_src>
import functools

import jax
import jax.numpy as jnp
from jax.experimental import pallas as pl
from jax.experimental.pallas import tpu as pltpu

# Logical layer dimensions (see NOTE above) and their 128-lane padded versions.
DIMS = [784, 600, 200, 100, 10]


def _round_up(x, m):
    return (x + m - 1) // m * m


IN_PAD = _round_up(DIMS[0], 128)                    # 896
OUT_PADS = [_round_up(d, 128) for d in DIMS[1:]]    # [640, 256, 128, 128]
N_PAD = OUT_PADS[-1]                                # 128 (padded output width)
VMEM_LIMIT = 32 * 1024 * 1024


def _mlp_logits_kernel(n_valid,
                       x_ref,
                       w1_ref, b1_ref, w2_ref, b2_ref,
                       w3_ref, b3_ref, w4_ref, b4_ref,
                       logits_ref, stats_ref,
                       m_sc, l_sc):
    """Stage 1: per-batch-tile MLP (4 bf16 MXU matmuls, f32 accum) + online
    per-column (max, sum-of-exp) carry for the softmax over the batch axis."""
    i = pl.program_id(0)
    tb = x_ref.shape[0]

    @pl.when(i == 0)
    def _():
        m_sc[...] = jnp.full(m_sc.shape, -jnp.inf, dtype=m_sc.dtype)
        l_sc[...] = jnp.zeros(l_sc.shape, dtype=l_sc.dtype)

    h = x_ref[...]
    for w_ref, b_ref in ((w1_ref, b1_ref), (w2_ref, b2_ref),
                         (w3_ref, b3_ref), (w4_ref, b4_ref)):
        h = jnp.dot(h.astype(jnp.bfloat16), w_ref[...],
                    preferred_element_type=jnp.float32) + b_ref[...]
        h = jnp.maximum(h, 0.0)

    logits_ref[...] = h

    # Mask out zero-padded batch rows (only needed when B % tile != 0).
    if n_valid % tb != 0:
        row = i * tb + jax.lax.broadcasted_iota(jnp.int32, (tb, 1), 0)
        valid = row < n_valid
        h_for_max = jnp.where(valid, h, -jnp.inf)
    else:
        valid = None
        h_for_max = h

    # Online softmax carry over the batch (grid) axis, per column.
    tile_max = jnp.max(h_for_max, axis=0, keepdims=True)          # (1, N_PAD)
    m_new = jnp.maximum(m_sc[...], tile_max)
    p = jnp.exp(h - m_new)
    if valid is not None:
        p = jnp.where(valid, p, 0.0)
    l_sc[...] = jnp.exp(m_sc[...] - m_new) * l_sc[...] + jnp.sum(
        p, axis=0, keepdims=True)
    m_sc[...] = m_new

    @pl.when(i == pl.num_programs(0) - 1)
    def _():
        stats_ref[0:1, :] = m_sc[...]
        stats_ref[1:2, :] = l_sc[...]


def _softmax_normalize_kernel(logits_ref, stats_ref, o_ref):
    """Stage 2: out = exp(h - m) / l with the global per-column stats."""
    m = stats_ref[0:1, :]
    inv_l = pl.reciprocal(stats_ref[1:2, :], approx=True)
    o_ref[...] = jnp.exp(logits_ref[...] - m) * inv_l


@jax.jit
def mlp_forward(x, params):
    """x: (B, C, H, W) float32 with C*H*W == 784. params: list of (W, b)
    with W shape (in_features, out_features), b shape (1, out_features)."""
    b_true = x.shape[0]
    x_flat = x.reshape(b_true, -1).astype(jnp.float32)
    assert x_flat.shape[1] == DIMS[0]

    # --- batch tiling (sublane-aligned; padded rows are masked out of the
    # softmax stats and sliced off at the end) ---
    if b_true >= 256:
        tb = 256
        b_pad = _round_up(b_true, tb)
    else:
        b_pad = _round_up(b_true, 8)
        tb = b_pad
    num_tiles = b_pad // tb

    x_pad = jnp.pad(x_flat, ((0, b_pad - b_true), (0, IN_PAD - DIMS[0])))

    # --- pad feature dims to 128-lane multiples; weights -> bf16, biases f32 ---
    in_dims = [IN_PAD] + OUT_PADS[:-1]
    flat_params = []
    for (w, bias), in_p, out_p in zip(params, in_dims, OUT_PADS):
        wp = jnp.pad(w, ((0, in_p - w.shape[0]),
                         (0, out_p - w.shape[1]))).astype(jnp.bfloat16)
        bp = jnp.pad(bias, ((0, 0), (0, out_p - bias.shape[1]))).astype(jnp.float32)
        flat_params.extend([wp, bp])

    # --- stage 1: streamed MLP + online softmax stats over the batch axis ---
    in_specs = [pl.BlockSpec((tb, IN_PAD), lambda i: (i, 0))]
    for p in flat_params:
        in_specs.append(pl.BlockSpec(p.shape, lambda i: (0, 0)))  # VMEM-resident

    macs = sum(a * b for a, b in zip(in_dims, OUT_PADS))
    weight_bytes = sum(a * b * 2 for a, b in zip(in_dims, OUT_PADS))
    cost = pl.CostEstimate(
        flops=2 * b_pad * macs,
        transcendentals=b_pad * N_PAD,
        bytes_accessed=weight_bytes + b_pad * IN_PAD * 4 + 2 * b_pad * N_PAD * 4)

    logits, stats = pl.pallas_call(
        functools.partial(_mlp_logits_kernel, b_true),
        out_shape=(jax.ShapeDtypeStruct((b_pad, N_PAD), jnp.float32),
                   jax.ShapeDtypeStruct((2, N_PAD), jnp.float32)),
        grid_spec=pltpu.PrefetchScalarGridSpec(
            num_scalar_prefetch=0,
            grid=(num_tiles,),
            in_specs=in_specs,
            out_specs=(pl.BlockSpec((tb, N_PAD), lambda i: (i, 0)),
                       pl.BlockSpec((2, N_PAD), lambda i: (0, 0))),
            scratch_shapes=[pltpu.VMEM((1, N_PAD), jnp.float32),
                            pltpu.VMEM((1, N_PAD), jnp.float32)]),
        compiler_params=pltpu.CompilerParams(
            dimension_semantics=("arbitrary",),
            vmem_limit_bytes=VMEM_LIMIT),
        cost_estimate=cost,
    )(x_pad, *flat_params)

    # --- stage 2: normalize with the global per-column (m, l) ---
    out_padded = pl.pallas_call(
        _softmax_normalize_kernel,
        out_shape=jax.ShapeDtypeStruct((b_pad, N_PAD), jnp.float32),
        grid_spec=pltpu.PrefetchScalarGridSpec(
            num_scalar_prefetch=0,
            grid=(num_tiles,),
            in_specs=[pl.BlockSpec((tb, N_PAD), lambda i: (i, 0)),
                      pl.BlockSpec((2, N_PAD), lambda i: (0, 0))],
            out_specs=pl.BlockSpec((tb, N_PAD), lambda i: (i, 0))),
        compiler_params=pltpu.CompilerParams(
            dimension_semantics=("parallel",),
            vmem_limit_bytes=VMEM_LIMIT),
    )(logits, stats)

    return out_padded[:b_true, :DIMS[-1]]


def init_params(key):
    """Deterministic PyTorch-style Linear init: U(-1/sqrt(fan_in), 1/sqrt(fan_in))."""
    params = []
    for fan_in, fan_out in zip(DIMS[:-1], DIMS[1:]):
        key, kw, kb = jax.random.split(key, 3)
        bound = 1.0 / jnp.sqrt(jnp.float32(fan_in))
        w = jax.random.uniform(kw, (fan_in, fan_out), jnp.float32, -bound, bound)
        bias = jax.random.uniform(kb, (1, fan_out), jnp.float32, -bound, bound)
        params.append((w, bias))
    return params


def reference_forward(x, params):
    """Same-precision (bf16 matmul, f32 accum) JAX reference."""
    h = x.reshape(x.shape[0], -1).astype(jnp.float32)
    for w, bias in params:
        h = jnp.dot(h.astype(jnp.bfloat16), w.astype(jnp.bfloat16),
                    preferred_element_type=jnp.float32) + bias
        h = jnp.maximum(h, 0.0)
    return jax.nn.softmax(h, axis=0)


if __name__ == "__main__":
    key = jax.random.PRNGKey(0)
    key, kx = jax.random.split(key)

    # Small MNIST-like batch: (B=8, C=1, H=28, W=28) -> flattened feature 784.
    x = jax.random.normal(kx, (8, 1, 28, 28), dtype=jnp.float32)
    params = init_params(key)

    out = jax.block_until_ready(mlp_forward(x, params))
    ref = reference_forward(x, params)

    assert out.shape == (8, 10)
    max_err = float(jnp.max(jnp.abs(out - ref)))
    assert jnp.allclose(out, ref, atol=1e-2, rtol=1e-2), (
        f"mismatch vs JAX reference (max abs err {max_err})")
    # softmax over dim=0: every output column must sum to ~1.
    assert jnp.allclose(jnp.sum(out, axis=0), jnp.ones((10,)), atol=1e-2)

    print("KERNEL_OK")
</pallas_src>

<mosaic_0001>
module attributes {stable_mosaic.version = 11 : i64} {
  func.func @_softmax_normalize_kernel(%arg0: i32, %arg1: memref<8x128xf32, #tpu.memory_space<vmem>>, %arg2: memref<2x128xf32, #tpu.memory_space<vmem>>, %arg3: memref<8x128xf32, #tpu.memory_space<vmem>>) attributes {dimension_semantics = [#tpu.dimension_semantics<parallel>], iteration_bounds = array<i64: 1>, scalar_prefetch = 0 : i64, scratch_operands = 0 : i64, tpu.core_type = #tpu.core_type<tc>, window_params = [{transform_indices = @transform_0, window_bounds = array<i64: 8, 128>}, {pipeline_mode = #tpu.pipeline_mode<synchronous>, transform_indices = @transform_1, window_bounds = array<i64: 2, 128>}, {transform_indices = @transform_2, window_bounds = array<i64: 8, 128>}]} {
    %c0 = arith.constant 0 : index
    %c0_0 = arith.constant 0 : index
    %0 = vector.load %arg2[%c0, %c0_0] : memref<2x128xf32, #tpu.memory_space<vmem>>, vector<1x128xf32>
    %c1 = arith.constant 1 : index
    %c0_1 = arith.constant 0 : index
    %1 = vector.load %arg2[%c1, %c0_1] : memref<2x128xf32, #tpu.memory_space<vmem>>, vector<1x128xf32>
    %2 = tpu.reciprocal %1 {approx = true} : vector<1x128xf32> -> vector<1x128xf32>
    %c0_2 = arith.constant 0 : index
    %c0_3 = arith.constant 0 : index
    %3 = vector.load %arg1[%c0_2, %c0_3] : memref<8x128xf32, #tpu.memory_space<vmem>>, vector<8x128xf32>
    %4 = vector.broadcast %0 : vector<1x128xf32> to vector<8x128xf32>
    %5 = arith.subf %3, %4 : vector<8x128xf32>
    %6 = math.exp %5 : vector<8x128xf32>
    %7 = vector.broadcast %2 : vector<1x128xf32> to vector<8x128xf32>
    %8 = arith.mulf %6, %7 : vector<8x128xf32>
    %c0_4 = arith.constant 0 : index
    %c0_5 = arith.constant 0 : index
    %9 = vector.load %arg3[%c0_4, %c0_5] : memref<8x128xf32, #tpu.memory_space<vmem>>, vector<8x128xf32>
    tpu.vector_store %arg3[%c0_4, %c0_5], %8 {strides = array<i32>} : memref<8x128xf32, #tpu.memory_space<vmem>>, vector<8x128xf32>,
    return
  }
  func.func @transform_0(%arg0: i32) -> (i32, i32) {
    %c0_i32 = arith.constant 0 : i32
    %c0_i32_0 = arith.constant 0 : i32
    return %arg0, %c0_i32 : i32, i32
  }
  func.func @transform_1(%arg0: i32) -> (i32, i32) {
    %c0_i32 = arith.constant 0 : i32
    %c0_i32_0 = arith.constant 0 : i32
    %c0_i32_1 = arith.constant 0 : i32
    return %c0_i32, %c0_i32_0 : i32, i32
  }
  func.func @transform_2(%arg0: i32) -> (i32, i32) {
    %c0_i32 = arith.constant 0 : i32
    %c0_i32_0 = arith.constant 0 : i32
    return %arg0, %c0_i32 : i32, i32
  }
}

module attributes {stable_mosaic.version = 11 : i64} {
  func.func @_mlp_logits_kernel(%arg0: i32, %arg1: memref<8x896xf32, #tpu.memory_space<vmem>>, %arg2: memref<896x640xbf16, #tpu.memory_space<vmem>>, %arg3: memref<1x640xf32, #tpu.memory_space<vmem>>, %arg4: memref<640x256xbf16, #tpu.memory_space<vmem>>, %arg5: memref<1x256xf32, #tpu.memory_space<vmem>>, %arg6: memref<256x128xbf16, #tpu.memory_space<vmem>>, %arg7: memref<1x128xf32, #tpu.memory_space<vmem>>, %arg8: memref<128x128xbf16, #tpu.memory_space<vmem>>, %arg9: memref<1x128xf32, #tpu.memory_space<vmem>>, %arg10: memref<8x128xf32, #tpu.memory_space<vmem>>, %arg11: memref<2x128xf32, #tpu.memory_space<vmem>>, %arg12: memref<1x128xf32, #tpu.memory_space<vmem>>, %arg13: memref<1x128xf32, #tpu.memory_space<vmem>>) attributes {dimension_semantics = [#tpu.dimension_semantics<arbitrary>], iteration_bounds = array<i64: 1>, scalar_prefetch = 0 : i64, scratch_operands = 2 : i64, tpu.core_type = #tpu.core_type<tc>, window_params = [{transform_indices = @transform_0, window_bounds = array<i64: 8, 896>}, {pipeline_mode = #tpu.pipeline_mode<synchronous>, transform_indices = @transform_1, window_bounds = array<i64: 896, 640>}, {pipeline_mode = #tpu.pipeline_mode<synchronous>, transform_indices = @transform_2, window_bounds = array<i64: 1, 640>}, {pipeline_mode = #tpu.pipeline_mode<synchronous>, transform_indices = @transform_3, window_bounds = array<i64: 640, 256>}, {pipeline_mode = #tpu.pipeline_mode<synchronous>, transform_indices = @transform_4, window_bounds = array<i64: 1, 256>}, {pipeline_mode = #tpu.pipeline_mode<synchronous>, transform_indices = @transform_5, window_bounds = array<i64: 256, 128>}, {pipeline_mode = #tpu.pipeline_mode<synchronous>, transform_indices = @transform_6, window_bounds = array<i64: 1, 128>}, {pipeline_mode = #tpu.pipeline_mode<synchronous>, transform_indices = @transform_7, window_bounds = array<i64: 128, 128>}, {pipeline_mode = #tpu.pipeline_mode<synchronous>, transform_indices = @transform_8, window_bounds = array<i64: 1, 128>}, {transform_indices = @transform_9, window_bounds = array<i64: 8, 128>}, {pipeline_mode = #tpu.pipeline_mode<synchronous>, transform_indices = @transform_10, window_bounds = array<i64: 2, 128>}]} {
    %c0_i32 = arith.constant 0 : i32
    %0 = arith.cmpi eq, %arg0, %c0_i32 : i32
    %1 = arith.extui %0 : i1 to i32
    %c0_i32_0 = arith.constant 0 : i32
    %2 = arith.cmpi ne, %1, %c0_i32_0 : i32
    scf.if %2 {
      %cst_41 = arith.constant 0xFF800000 : f32
      %57 = vector.broadcast %cst_41 : f32 to vector<1x128xf32>
      %c0_42 = arith.constant 0 : index
      %c0_43 = arith.constant 0 : index
      %58 = vector.load %arg12[%c0_42, %c0_43] : memref<1x128xf32, #tpu.memory_space<vmem>>, vector<1x128xf32>
      tpu.vector_store %arg12[%c0_42, %c0_43], %57 {strides = array<i32>} : memref<1x128xf32, #tpu.memory_space<vmem>>, vector<1x128xf32>,
      %cst_44 = arith.constant 0.000000e+00 : f32
      %59 = vector.broadcast %cst_44 : f32 to vector<1x128xf32>
      %c0_45 = arith.constant 0 : index
      %c0_46 = arith.constant 0 : index
      %60 = vector.load %arg13[%c0_45, %c0_46] : memref<1x128xf32, #tpu.memory_space<vmem>>, vector<1x128xf32>
      tpu.vector_store %arg13[%c0_45, %c0_46], %59 {strides = array<i32>} : memref<1x128xf32, #tpu.memory_space<vmem>>, vector<1x128xf32>,
    } else {
    }
    %c0 = arith.constant 0 : index
    %c0_1 = arith.constant 0 : index
    %3 = vector.load %arg1[%c0, %c0_1] : memref<8x896xf32, #tpu.memory_space<vmem>>, vector<8x896xf32>
    %4 = arith.truncf %3 : vector<8x896xf32> to vector<8x896xbf16>
    %c0_2 = arith.constant 0 : index
    %c0_3 = arith.constant 0 : index
    %5 = vector.load %arg2[%c0_2, %c0_3] : memref<896x640xbf16, #tpu.memory_space<vmem>>, vector<896x640xbf16>
    %cst = arith.constant dense<0.000000e+00> : vector<8x640xf32>
    %6 = tpu.matmul %4, %5, %cst {dimension_numbers = #tpu.dot_dimension_numbers<[1], [0], [0], [1], [0, 0, 1, 1], [], []>} : vector<8x896xbf16>, vector<896x640xbf16>, vector<8x640xf32> -> vector<8x640xf32>
    %c0_4 = arith.constant 0 : index
    %c0_5 = arith.constant 0 : index
    %7 = vector.load %arg3[%c0_4, %c0_5] : memref<1x640xf32, #tpu.memory_space<vmem>>, vector<1x640xf32>
    %8 = vector.broadcast %7 : vector<1x640xf32> to vector<8x640xf32>
    %9 = arith.addf %6, %8 : vector<8x640xf32>
    %cst_6 = arith.constant 0.000000e+00 : f32
    %10 = vector.broadcast %cst_6 : f32 to vector<8x640xf32>
    %11 = arith.maximumf %9, %10 : vector<8x640xf32>
    %12 = arith.truncf %11 : vector<8x640xf32> to vector<8x640xbf16>
    %c0_7 = arith.constant 0 : index
    %c0_8 = arith.constant 0 : index
    %13 = vector.load %arg4[%c0_7, %c0_8] : memref<640x256xbf16, #tpu.memory_space<vmem>>, vector<640x256xbf16>
    %cst_9 = arith.constant dense<0.000000e+00> : vector<8x256xf32>
    %14 = tpu.matmul %12, %13, %cst_9 {dimension_numbers = #tpu.dot_dimension_numbers<[1], [0], [0], [1], [0, 0, 1, 1], [], []>} : vector<8x640xbf16>, vector<640x256xbf16>, vector<8x256xf32> -> vector<8x256xf32>
    %c0_10 = arith.constant 0 : index
    %c0_11 = arith.constant 0 : index
    %15 = vector.load %arg5[%c0_10, %c0_11] : memref<1x256xf32, #tpu.memory_space<vmem>>, vector<1x256xf32>
    %16 = vector.broadcast %15 : vector<1x256xf32> to vector<8x256xf32>
    %17 = arith.addf %14, %16 : vector<8x256xf32>
    %cst_12 = arith.constant 0.000000e+00 : f32
    %18 = vector.broadcast %cst_12 : f32 to vector<8x256xf32>
    %19 = arith.maximumf %17, %18 : vector<8x256xf32>
    %20 = arith.truncf %19 : vector<8x256xf32> to vector<8x256xbf16>
    %c0_13 = arith.constant 0 : index
    %c0_14 = arith.constant 0 : index
    %21 = vector.load %arg6[%c0_13, %c0_14] : memref<256x128xbf16, #tpu.memory_space<vmem>>, vector<256x128xbf16>
    %cst_15 = arith.constant dense<0.000000e+00> : vector<8x128xf32>
    %22 = tpu.matmul %20, %21, %cst_15 {dimension_numbers = #tpu.dot_dimension_numbers<[1], [0], [0], [1], [0, 0, 1, 1], [], []>} : vector<8x256xbf16>, vector<256x128xbf16>, vector<8x128xf32> -> vector<8x128xf32>
    %c0_16 = arith.constant 0 : index
    %c0_17 = arith.constant 0 : index
    %23 = vector.load %arg7[%c0_16, %c0_17] : memref<1x128xf32, #tpu.memory_space<vmem>>, vector<1x128xf32>
    %24 = vector.broadcast %23 : vector<1x128xf32> to vector<8x128xf32>
    %25 = arith.addf %22, %24 : vector<8x128xf32>
    %cst_18 = arith.constant 0.000000e+00 : f32
    %26 = vector.broadcast %cst_18 : f32 to vector<8x128xf32>
    %27 = arith.maximumf %25, %26 : vector<8x128xf32>
    %28 = arith.truncf %27 : vector<8x128xf32> to vector<8x128xbf16>
    %c0_19 = arith.constant 0 : index
    %c0_20 = arith.constant 0 : index
    %29 = vector.load %arg8[%c0_19, %c0_20] : memref<128x128xbf16, #tpu.memory_space<vmem>>, vector<128x128xbf16>
    %cst_21 = arith.constant dense<0.000000e+00> : vector<8x128xf32>
    %30 = tpu.matmul %28, %29, %cst_21 {dimension_numbers = #tpu.dot_dimension_numbers<[1], [0], [0], [1], [0, 0, 1, 1], [], []>} : vector<8x128xbf16>, vector<128x128xbf16>, vector<8x128xf32> -> vector<8x128xf32>
    %c0_22 = arith.constant 0 : index
    %c0_23 = arith.constant 0 : index
    %31 = vector.load %arg9[%c0_22, %c0_23] : memref<1x128xf32, #tpu.memory_space<vmem>>, vector<1x128xf32>
    %32 = vector.broadcast %31 : vector<1x128xf32> to vector<8x128xf32>
    %33 = arith.addf %30, %32 : vector<8x128xf32>
    %cst_24 = arith.constant 0.000000e+00 : f32
    %34 = vector.broadcast %cst_24 : f32 to vector<8x128xf32>
    %35 = arith.maximumf %33, %34 : vector<8x128xf32>
    %c0_25 = arith.constant 0 : index
    %c0_26 = arith.constant 0 : index
    %36 = vector.load %arg10[%c0_25, %c0_26] : memref<8x128xf32, #tpu.memory_space<vmem>>, vector<8x128xf32>
    tpu.vector_store %arg10[%c0_25, %c0_26], %35 {strides = array<i32>} : memref<8x128xf32, #tpu.memory_space<vmem>>, vector<8x128xf32>,
    %cst_27 = arith.constant dense<0xFF800000> : vector<128xf32>
    %37 = vector.multi_reduction <maximumf>, %35, %cst_27 [0] : vector<8x128xf32> to vector<128xf32>
    %38 = vector.shape_cast %37 : vector<128xf32> to vector<1x128xf32>
    %c0_28 = arith.constant 0 : index
    %c0_29 = arith.constant 0 : index
    %39 = vector.load %arg12[%c0_28, %c0_29] : memref<1x128xf32, #tpu.memory_space<vmem>>, vector<1x128xf32>
    %40 = arith.maximumf %39, %38 : vector<1x128xf32>
    %41 = vector.broadcast %40 : vector<1x128xf32> to vector<8x128xf32>
    %42 = arith.subf %35, %41 : vector<8x128xf32>
    %43 = math.exp %42 : vector<8x128xf32>
    %c0_30 = arith.constant 0 : index
    %c0_31 = arith.constant 0 : index
    %44 = vector.load %arg12[%c0_30, %c0_31] : memref<1x128xf32, #tpu.memory_space<vmem>>, vector<1x128xf32>
    %45 = arith.subf %44, %40 : vector<1x128xf32>
    %46 = math.exp %45 : vector<1x128xf32>
    %c0_32 = arith.constant 0 : index
    %c0_33 = arith.constant 0 : index
    %47 = vector.load %arg13[%c0_32, %c0_33] : memref<1x128xf32, #tpu.memory_space<vmem>>, vector<1x128xf32>
    %48 = arith.mulf %46, %47 : vector<1x128xf32>
    %cst_34 = arith.constant dense<0.000000e+00> : vector<128xf32>
    %49 = vector.multi_reduction <add>, %43, %cst_34 [0] : vector<8x128xf32> to vector<128xf32>
    %50 = vector.shape_cast %49 : vector<128xf32> to vector<1x128xf32>
    %51 = arith.addf %48, %50 : vector<1x128xf32>
    %c0_35 = arith.constant 0 : index
    %c0_36 = arith.constant 0 : index
    %52 = vector.load %arg13[%c0_35, %c0_36] : memref<1x128xf32, #tpu.memory_space<vmem>>, vector<1x128xf32>
    tpu.vector_store %arg13[%c0_35, %c0_36], %51 {strides = array<i32>} : memref<1x128xf32, #tpu.memory_space<vmem>>, vector<1x128xf32>,
    %c0_37 = arith.constant 0 : index
    %c0_38 = arith.constant 0 : index
    %53 = vector.load %arg12[%c0_37, %c0_38] : memref<1x128xf32, #tpu.memory_space<vmem>>, vector<1x128xf32>
    tpu.vector_store %arg12[%c0_37, %c0_38], %40 {strides = array<i32>} : memref<1x128xf32, #tpu.memory_space<vmem>>, vector<1x128xf32>,
    %c0_i32_39 = arith.constant 0 : i32
    %54 = arith.cmpi eq, %arg0, %c0_i32_39 : i32
    %55 = arith.extui %54 : i1 to i32
    %c0_i32_40 = arith.constant 0 : i32
    %56 = arith.cmpi ne, %55, %c0_i32_40 : i32
    scf.if %56 {
      %c0_41 = arith.constant 0 : index
      %c0_42 = arith.constant 0 : index
      %57 = vector.load %arg12[%c0_41, %c0_42] : memref<1x128xf32, #tpu.memory_space<vmem>>, vector<1x128xf32>
      %c0_43 = arith.constant 0 : index
      %c0_44 = arith.constant 0 : index
      %58 = vector.load %arg11[%c0_43, %c0_44] : memref<2x128xf32, #tpu.memory_space<vmem>>, vector<1x128xf32>
      tpu.vector_store %arg11[%c0_43, %c0_44], %57 {strides = array<i32>} : memref<2x128xf32, #tpu.memory_space<vmem>>, vector<1x128xf32>,
      %c0_45 = arith.constant 0 : index
      %c0_46 = arith.constant 0 : index
      %59 = vector.load %arg13[%c0_45, %c0_46] : memref<1x128xf32, #tpu.memory_space<vmem>>, vector<1x128xf32>
      %c1 = arith.constant 1 : index
      %c0_47 = arith.constant 0 : index
      %60 = vector.load %arg11[%c1, %c0_47] : memref<2x128xf32, #tpu.memory_space<vmem>>, vector<1x128xf32>
      tpu.vector_store %arg11[%c1, %c0_47], %59 {strides = array<i32>} : memref<2x128xf32, #tpu.memory_space<vmem>>, vector<1x128xf32>,
    } else {
    }
    return
  }
  func.func @transform_0(%arg0: i32) -> (i32, i32) {
    %c0_i32 = arith.constant 0 : i32
    %c0_i32_0 = arith.constant 0 : i32
    return %arg0, %c0_i32 : i32, i32
  }
  func.func @transform_1(%arg0: i32) -> (i32, i32) {
    %c0_i32 = arith.constant 0 : i32
    %c0_i32_0 = arith.constant 0 : i32
    %c0_i32_1 = arith.constant 0 : i32
    return %c0_i32, %c0_i32_0 : i32, i32
  }
  func.func @transform_2(%arg0: i32) -> (i32, i32) {
    %c0_i32 = arith.constant 0 : i32
    %c0_i32_0 = arith.constant 0 : i32
    %c0_i32_1 = arith.constant 0 : i32
    return %c0_i32, %c0_i32_0 : i32, i32
  }
  func.func @transform_3(%arg0: i32) -> (i32, i32) {
    %c0_i32 = arith.constant 0 : i32
    %c0_i32_0 = arith.constant 0 : i32
    %c0_i32_1 = arith.constant 0 : i32
    return %c0_i32, %c0_i32_0 : i32, i32
  }
  func.func @transform_4(%arg0: i32) -> (i32, i32) {
    %c0_i32 = arith.constant 0 : i32
    %c0_i32_0 = arith.constant 0 : i32
    %c0_i32_1 = arith.constant 0 : i32
    return %c0_i32, %c0_i32_0 : i32, i32
  }
  func.func @transform_5(%arg0: i32) -> (i32, i32) {
    %c0_i32 = arith.constant 0 : i32
    %c0_i32_0 = arith.constant 0 : i32
    %c0_i32_1 = arith.constant 0 : i32
    return %c0_i32, %c0_i32_0 : i32, i32
  }
  func.func @transform_6(%arg0: i32) -> (i32, i32) {
    %c0_i32 = arith.constant 0 : i32
    %c0_i32_0 = arith.constant 0 : i32
    %c0_i32_1 = arith.constant 0 : i32
    return %c0_i32, %c0_i32_0 : i32, i32
  }
  func.func @transform_7(%arg0: i32) -> (i32, i32) {
    %c0_i32 = arith.constant 0 : i32
    %c0_i32_0 = arith.constant 0 : i32
    %c0_i32_1 = arith.constant 0 : i32
    return %c0_i32, %c0_i32_0 : i32, i32
  }
  func.func @transform_8(%arg0: i32) -> (i32, i32) {
    %c0_i32 = arith.constant 0 : i32
    %c0_i32_0 = arith.constant 0 : i32
    %c0_i32_1 = arith.constant 0 : i32
    return %c0_i32, %c0_i32_0 : i32, i32
  }
  func.func @transform_9(%arg0: i32) -> (i32, i32) {
    %c0_i32 = arith.constant 0 : i32
    %c0_i32_0 = arith.constant 0 : i32
    return %arg0, %c0_i32 : i32, i32
  }
  func.func @transform_10(%arg0: i32) -> (i32, i32) {
    %c0_i32 = arith.constant 0 : i32
    %c0_i32_0 = arith.constant 0 : i32
    %c0_i32_1 = arith.constant 0 : i32
    return %c0_i32, %c0_i32_0 : i32, i32
  }
}

</mosaic_0001>

<llo_original>
// kernel: mlp_forward.3
$region0: #{mlp_forward.3}
  #allocation0 [shape = 'u32[]', space=smem, size = 0x4, offset = 0x4, fixed_abs, tag = 'smem constant byte address 0x4 - core index']
  #allocation1 [shape = 'u32[144,128]{1,0:T(1,128)}', space=vmem, size = 0x12000, scoped, tag = 'internal scratch']
  %s0 = inlined_call_operand.vmem [shape: f32[8,128], index: 0, kind: input, shape index: {}]
  %s1 = inlined_call_operand.vmem [shape: f32[2,128], index: 1, kind: input, shape index: {}]
  %s2 = inlined_call_operand.hbm [shape: f32[8,128], index: 2, kind: output, shape index: {}]
  %s3 = sld [smem:[#allocation0]]
  $region18: #{mlp_forward.3} parent=0
    _
  %s5 = ssub.s32 1, %s3
  %s6 = scalar_select 0, %s5, %s3
  $region1: #{mlp_forward.3} parent=0
    #allocation2 [shape = 'u8[4096]{0}', space=vmem, size = 0x1000, scoped, tag = 'output window, operand 0, single buffered']
    #allocation3 [shape = 's32[1]{0}', space=sflag, size = 0x4, scoped, tag = 'scoped memory for mlp_forward.3']
    %7 = vsyncpa [#allocation3], 0
    // Predicated region
    $region2: #{mlp_forward.3} parent=1 // pred_check
      _
    $region3: #{mlp_forward.3} parent=1 // pred_check_branch
      %9 = sbr.rel (0) target = $region5
    $region4: #{mlp_forward.3} parent=1 // pred_region
      _
    $region5: #{mlp_forward.3} parent=1 // pred_fallthru
      _
    // Predicated region
    $region6: #{mlp_forward.3} parent=1 // pred_check
      _
    $region7: #{mlp_forward.3} parent=1 // pred_check_branch
      %11 = sbr.rel (0) target = $region9
    $region8: #{mlp_forward.3} parent=1 // pred_region
      _
    $region9: #{mlp_forward.3} parent=1 // pred_fallthru
      _
    %v12 = vld [vmem:[%s1] sm:$0x1]
    %v13 = vld [vmem:[%s1 + $0x1] sm:$0x1]
    %v14 = vrcp.pop %v13
    %v15 = vld [vmem:[%s0] sm:$0xff]
    %v16 = vlaneseq
    %v17 = vshrl.u32 %v16, 7
    %v18 = vsub.s32 0, %v17
    %v19 = vrot.slane %v12, %v18
    %v20 = vsub.f32 %v15, %v19
    %v21 = vmul.f32 %v20, 1.442695
    %v22 = vpow.pop %v21
    %v23 = vlaneseq
    %v24 = vshrl.u32 %v23, 7
    %v25 = vsub.s32 0, %v24
    %v26 = vrot.slane %v14, %v25
    %v27 = vmul.f32 %v22, %v26
    %28 = vst [vmem:[#allocation2] sm:$0xff] %v27
    // Predicated region
    $region10: #{mlp_forward.3} parent=1 // pred_check
      _
    $region11: #{mlp_forward.3} parent=1 // pred_check_branch
      %30 = sbr.rel (0) target = $region13
    $region12: #{mlp_forward.3} parent=1 // pred_region
      %s32 = ssub.s32 128, 128
      %33 = vsyncadd [#allocation3], %s32
      %s35 = sshll.u32 [#allocation2], 4
      %s36 = int_to_ptr.vmem [resolvable:$true] %s35
      %38 = dma.vmem_to_hbm [thread:$0]  %s36, 128, %s2, [#allocation3]
    $region13: #{mlp_forward.3} parent=1 // pred_fallthru
      _
    // Predicated region
    $region14: #{mlp_forward.3} parent=1 // pred_check
      _
    $region15: #{mlp_forward.3} parent=1 // pred_check_branch
      %40 = sbr.rel (0) target = $region17
    $region16: #{mlp_forward.3} parent=1 // pred_region
      %41 = dma.done [#allocation3], 128
    $region17: #{mlp_forward.3} parent=1 // pred_fallthru
      _
    %42 = vsyncpa [#allocation3], 1

// kernel: mlp_forward.2
$region0: #{mlp_forward.2}
  #allocation0 [shape = 'u32[]', space=smem, size = 0x4, offset = 0x4, fixed_abs, tag = 'smem constant byte address 0x4 - core index']
  #allocation1 [shape = 'u32[144,128]{1,0:T(1,128)}', space=vmem, size = 0x12000, scoped, tag = 'internal scratch']
  #allocation2 [shape = 'f32[1,128]{1,0:T(1,128)}', space=vmem, size = 0x200, scoped, tag = 'scratch operand']
  #allocation3 [shape = 'f32[1,128]{1,0:T(1,128)}', space=vmem, size = 0x200, scoped, tag = 'scratch operand']
  %s0 = inlined_call_operand.vmem [shape: f32[8,896], index: 0, kind: input, shape index: {}]
  %s1 = inlined_call_operand.vmem [shape: bf16[896,640], index: 1, kind: input, shape index: {}]
  %s2 = inlined_call_operand.vmem [shape: f32[1,640], index: 2, kind: input, shape index: {}]
  %s3 = inlined_call_operand.vmem [shape: bf16[640,256], index: 3, kind: input, shape index: {}]
  %s4 = inlined_call_operand.vmem [shape: f32[1,256], index: 4, kind: input, shape index: {}]
  %s5 = inlined_call_operand.vmem [shape: bf16[256,128], index: 5, kind: input, shape index: {}]
  %s6 = inlined_call_operand.vmem [shape: f32[1,128], index: 6, kind: input, shape index: {}]
  %s7 = inlined_call_operand.vmem [shape: bf16[128,128], index: 7, kind: input, shape index: {}]
  %s8 = inlined_call_operand.vmem [shape: f32[1,128], index: 8, kind: input, shape index: {}]
  %s9 = inlined_call_operand.vmem [shape: f32[8,128], index: 9, kind: output, shape index: {0}]
  %s10 = inlined_call_operand.vmem [shape: f32[2,128], index: 10, kind: output, shape index: {1}]
  %11 = xla_tuple %s9, %s10
  %s12 = sld [smem:[#allocation0]]
  $region62: #{mlp_forward.2} parent=0
    _
  %s14 = ssub.s32 1, %s12
  %s15 = scalar_select 0, %s14, %s12
  // Predicated region
  $region2: #{mlp_forward.2} parent=0 // pred_check
    _
  $region3: #{mlp_forward.2} parent=0 // pred_check_branch
    %17 = sbr.rel (0) target = $region5
  $region4: #{mlp_forward.2} parent=0 // pred_region
    _
  $region5: #{mlp_forward.2} parent=0 // pred_fallthru
    _
  // Predicated region
  $region6: #{mlp_forward.2} parent=0 // pred_check
    _
  $region7: #{mlp_forward.2} parent=0 // pred_check_branch
    %19 = sbr.rel (0) target = $region9
  $region8: #{mlp_forward.2} parent=0 // pred_region
    _
  $region9: #{mlp_forward.2} parent=0 // pred_fallthru
    _
  // Predicated region
  $region10: #{mlp_forward.2} parent=0 // pred_check
    _
  $region11: #{mlp_forward.2} parent=0 // pred_check_branch
    %21 = sbr.rel (0) target = $region13
  $region12: #{mlp_forward.2} parent=0 // pred_region
    _
  $region13: #{mlp_forward.2} parent=0 // pred_fallthru
    _
  // Predicated region
  $region14: #{mlp_forward.2} parent=0 // pred_check
    _
  $region15: #{mlp_forward.2} parent=0 // pred_check_branch
    %23 = sbr.rel (0) target = $region17
  $region16: #{mlp_forward.2} parent=0 // pred_region
    _
  $region17: #{mlp_forward.2} parent=0 // pred_fallthru
    _
  // Predicated region
  $region18: #{mlp_forward.2} parent=0 // pred_check
    _
  $region19: #{mlp_forward.2} parent=0 // pred_check_branch
    %25 = sbr.rel (0) target = $region21
  $region20: #{mlp_forward.2} parent=0 // pred_region
    _
  $region21: #{mlp_forward.2} parent=0 // pred_fallthru
    _
  // Predicated region
  $region22: #{mlp_forward.2} parent=0 // pred_check
    _
  $region23: #{mlp_forward.2} parent=0 // pred_check_branch
    %27 = sbr.rel (0) target = $region25
  $region24: #{mlp_forward.2} parent=0 // pred_region
    _
  $region25: #{mlp_forward.2} parent=0 // pred_fallthru
    _
  // Predicated region
  $region26: #{mlp_forward.2} parent=0 // pred_check
    _
  $region27: #{mlp_forward.2} parent=0 // pred_check_branch
    %29 = sbr.rel (0) target = $region29
  $region28: #{mlp_forward.2} parent=0 // pred_region
    _
  $region29: #{mlp_forward.2} parent=0 // pred_fallthru
    _
  // Predicated region
  $region30: #{mlp_forward.2} parent=0 // pred_check
    _
  $region31: #{mlp_forward.2} parent=0 // pred_check_branch
    %31 = sbr.rel (0) target = $region33
  $region32: #{mlp_forward.2} parent=0 // pred_region
    _
  $region33: #{mlp_forward.2} parent=0 // pred_fallthru
    _
  // Predicated region
  $region34: #{mlp_forward.2} parent=0 // pred_check
    _
  $region35: #{mlp_forward.2} parent=0 // pred_check_branch
    %33 = sbr.rel (0) target = $region37
  $region36: #{mlp_forward.2} parent=0 // pred_region
    _
  $region37: #{mlp_forward.2} parent=0 // pred_fallthru
    _
  %p35 = scmp.eq.s32.totalorder 0, 0
  // Predicated region
  $region38: #{mlp_forward.2} parent=0 // pred_check
    %p36 = pneg %p35
  $region39: #{mlp_forward.2} parent=0 // pred_check_branch
    %38 = sbr.rel (%p36) target = $region41
  $region40: #{mlp_forward.2} parent=0 // pred_region
    %39 = vst [vmem:[#allocation2] sm:$0x1] -inf
    %40 = vst [vmem:[#allocation3] sm:$0x1] 0.0
  $region41: #{mlp_forward.2} parent=0 // pred_fallthru
    _
  %v41 = vld [vmem:[%s0] sm:$0xff]
  %v42 = vld [vmem:[%s0 + $0x8] sm:$0xff]
  %v43 = vld [vmem:[%s0 + $0x10] sm:$0xff]
  %v44 = vld [vmem:[%s0 + $0x18] sm:$0xff]
  %v45 = vld [vmem:[%s0 + $0x20] sm:$0xff]
  %v46 = vld [vmem:[%s0 + $0x28] sm:$0xff]
  %v47 = vld [vmem:[%s0 + $0x30] sm:$0xff]
  %v48 = vpack.c.bf16 %v41, %v41
  %v49 = vpack.c.bf16 %v42, %v42
  %v50 = vpack.c.bf16 %v43, %v43
  %v51 = vpack.c.bf16 %v44, %v44
  %v52 = vpack.c.bf16 %v45, %v45
  %v53 = vpack.c.bf16 %v46, %v46
  %v54 = vpack.c.bf16 %v47, %v47
  %v55 = vld [vmem:[%s1] sm:$0xff]
  %v56 = vld [vmem:[%s1 + $0x8] sm:$0xff]
  %v57 = vld [vmem:[%s1 + $0x10] sm:$0xf]
  %v58 = vld [vmem:[%s1 + $0x14] sm:$0xff]
  %v59 = vld [vmem:[%s1 + $0x1c] sm:$0xff]
  %v60 = vld [vmem:[%s1 + $0x24] sm:$0xf]
  %v61 = vld [vmem:[%s1 + $0x28] sm:$0xff]
  %v62 = vld [vmem:[%s1 + $0x30] sm:$0xff]
  %v63 = vld [vmem:[%s1 + $0x38] sm:$0xf]
  %v64 = vld [vmem:[%s1 + $0x3c] sm:$0xff]
  %v65 = vld [vmem:[%s1 + $0x44] sm:$0xff]
  %v66 = vld [vmem:[%s1 + $0x4c] sm:$0xf]
  %v67 = vld [vmem:[%s1 + $0x50] sm:$0xff]
  %v68 = vld [vmem:[%s1 + $0x58] sm:$0xff]
  %v69 = vld [vmem:[%s1 + $0x60] sm:$0xf]
  %v70 = vld [vmem:[%s1 + $0x64] sm:$0xff]
  %v71 = vld [vmem:[%s1 + $0x6c] sm:$0xff]
  %v72 = vld [vmem:[%s1 + $0x74] sm:$0xf]
  %v73 = vld [vmem:[%s1 + $0x78] sm:$0xff]
  %v74 = vld [vmem:[%s1 + $0x80] sm:$0xff]
  %v75 = vld [vmem:[%s1 + $0x88] sm:$0xf]
  %v76 = vld [vmem:[%s1 + $0x8c] sm:$0xff]
  %v77 = vld [vmem:[%s1 + $0x94] sm:$0xff]
  %v78 = vld [vmem:[%s1 + $0x9c] sm:$0xf]
  %v79 = vld [vmem:[%s1 + $0xa0] sm:$0xff]
  %v80 = vld [vmem:[%s1 + $0xa8] sm:$0xff]
  %v81 = vld [vmem:[%s1 + $0xb0] sm:$0xf]
  %v82 = vld [vmem:[%s1 + $0xb4] sm:$0xff]
  %v83 = vld [vmem:[%s1 + $0xbc] sm:$0xff]
  %v84 = vld [vmem:[%s1 + $0xc4] sm:$0xf]
  %v85 = vld [vmem:[%s1 + $0xc8] sm:$0xff]
  %v86 = vld [vmem:[%s1 + $0xd0] sm:$0xff]
  %v87 = vld [vmem:[%s1 + $0xd8] sm:$0xf]
  %v88 = vld [vmem:[%s1 + $0xdc] sm:$0xff]
  %v89 = vld [vmem:[%s1 + $0xe4] sm:$0xff]
  %v90 = vld [vmem:[%s1 + $0xec] sm:$0xf]
  %v91 = vld [vmem:[%s1 + $0xf0] sm:$0xff]
  %v92 = vld [vmem:[%s1 + $0xf8] sm:$0xff]
  %v93 = vld [vmem:[%s1 + $0x100] sm:$0xf]
  %v94 = vld [vmem:[%s1 + $0x104] sm:$0xff]
  %v95 = vld [vmem:[%s1 + $0x10c] sm:$0xff]
  %v96 = vld [vmem:[%s1 + $0x114] sm:$0xf]
  %v97 = vld [vmem:[%s1 + $0x118] sm:$0xff]
  %v98 = vld [vmem:[%s1 + $0x120] sm:$0xff]
  %v99 = vld [vmem:[%s1 + $0x128] sm:$0xf]
  %v100 = vld [vmem:[%s1 + $0x12c] sm:$0xff]
  %v101 = vld [vmem:[%s1 + $0x134] sm:$0xff]
  %v102 = vld [vmem:[%s1 + $0x13c] sm:$0xf]
  %v103 = vld [vmem:[%s1 + $0x140] sm:$0xff]
  %v104 = vld [vmem:[%s1 + $0x148] sm:$0xff]
  %v105 = vld [vmem:[%s1 + $0x150] sm:$0xf]
  %v106 = vld [vmem:[%s1 + $0x154] sm:$0xff]
  %v107 = vld [vmem:[%s1 + $0x15c] sm:$0xff]
  %v108 = vld [vmem:[%s1 + $0x164] sm:$0xf]
  %v109 = vld [vmem:[%s1 + $0x168] sm:$0xff]
  %v110 = vld [vmem:[%s1 + $0x170] sm:$0xff]
  %v111 = vld [vmem:[%s1 + $0x178] sm:$0xf]
  %v112 = vld [vmem:[%s1 + $0x17c] sm:$0xff]
  %v113 = vld [vmem:[%s1 + $0x184] sm:$0xff]
  %v114 = vld [vmem:[%s1 + $0x18c] sm:$0xf]
  %v115 = vld [vmem:[%s1 + $0x190] sm:$0xff]
  %v116 = vld [vmem:[%s1 + $0x198] sm:$0xff]
  %v117 = vld [vmem:[%s1 + $0x1a0] sm:$0xf]
  %v118 = vld [vmem:[%s1 + $0x1a4] sm:$0xff]
  %v119 = vld [vmem:[%s1 + $0x1ac] sm:$0xff]
  %v120 = vld [vmem:[%s1 + $0x1b4] sm:$0xf]
  %v121 = vld [vmem:[%s1 + $0x1b8] sm:$0xff]
  %v122 = vld [vmem:[%s1 + $0x1c0] sm:$0xff]
  %v123 = vld [vmem:[%s1 + $0x1c8] sm:$0xf]
  %v124 = vld [vmem:[%s1 + $0x1cc] sm:$0xff]
  %v125 = vld [vmem:[%s1 + $0x1d4] sm:$0xff]
  %v126 = vld [vmem:[%s1 + $0x1dc] sm:$0xf]
  %v127 = vld [vmem:[%s1 + $0x1e0] sm:$0xff]
  %v128 = vld [vmem:[%s1 + $0x1e8] sm:$0xff]
  %v129 = vld [vmem:[%s1 + $0x1f0] sm:$0xf]
  %v130 = vld [vmem:[%s1 + $0x1f4] sm:$0xff]
  %v131 = vld [vmem:[%s1 + $0x1fc] sm:$0xff]
  %v132 = vld [vmem:[%s1 + $0x204] sm:$0xf]
  %v133 = vld [vmem:[%s1 + $0x208] sm:$0xff]
  %v134 = vld [vmem:[%s1 + $0x210] sm:$0xff]
  %v135 = vld [vmem:[%s1 + $0x218] sm:$0xf]
  %v136 = vld [vmem:[%s1 + $0x21c] sm:$0xff]
  %v137 = vld [vmem:[%s1 + $0x224] sm:$0xff]
  %v138 = vld [vmem:[%s1 + $0x22c] sm:$0xf]
  %v139 = vld [vmem:[%s1 + $0x230] sm:$0xff]
  %v140 = vld [vmem:[%s1 + $0x238] sm:$0xff]
  %v141 = vld [vmem:[%s1 + $0x240] sm:$0xf]
  %v142 = vld [vmem:[%s1 + $0x244] sm:$0xff]
  %v143 = vld [vmem:[%s1 + $0x24c] sm:$0xff]
  %v144 = vld [vmem:[%s1 + $0x254] sm:$0xf]
  %v145 = vld [vmem:[%s1 + $0x258] sm:$0xff]
  %v146 = vld [vmem:[%s1 + $0x260] sm:$0xff]
  %v147 = vld [vmem:[%s1 + $0x268] sm:$0xf]
  %v148 = vld [vmem:[%s1 + $0x26c] sm:$0xff]
  %v149 = vld [vmem:[%s1 + $0x274] sm:$0xff]
  %v150 = vld [vmem:[%s1 + $0x27c] sm:$0xf]
  %v151 = vld [vmem:[%s1 + $0x280] sm:$0xff]
  %v152 = vld [vmem:[%s1 + $0x288] sm:$0xff]
  %v153 = vld [vmem:[%s1 + $0x290] sm:$0xf]
  %v154 = vld [vmem:[%s1 + $0x294] sm:$0xff]
  %v155 = vld [vmem:[%s1 + $0x29c] sm:$0xff]
  %v156 = vld [vmem:[%s1 + $0x2a4] sm:$0xf]
  %v157 = vld [vmem:[%s1 + $0x2a8] sm:$0xff]
  %v158 = vld [vmem:[%s1 + $0x2b0] sm:$0xff]
  %v159 = vld [vmem:[%s1 + $0x2b8] sm:$0xf]
  %v160 = vld [vmem:[%s1 + $0x2bc] sm:$0xff]
  %v161 = vld [vmem:[%s1 + $0x2c4] sm:$0xff]
  %v162 = vld [vmem:[%s1 + $0x2cc] sm:$0xf]
  %v163 = vld [vmem:[%s1 + $0x2d0] sm:$0xff]
  %v164 = vld [vmem:[%s1 + $0x2d8] sm:$0xff]
  %v165 = vld [vmem:[%s1 + $0x2e0] sm:$0xf]
  %v166 = vld [vmem:[%s1 + $0x2e4] sm:$0xff]
  %v167 = vld [vmem:[%s1 + $0x2ec] sm:$0xff]
  %v168 = vld [vmem:[%s1 + $0x2f4] sm:$0xf]
  %v169 = vld [vmem:[%s1 + $0x2f8] sm:$0xff]
  %v170 = vld [vmem:[%s1 + $0x300] sm:$0xff]
  %v171 = vld [vmem:[%s1 + $0x308] sm:$0xf]
  %v172 = vld [vmem:[%s1 + $0x30c] sm:$0xff]
  %v173 = vld [vmem:[%s1 + $0x314] sm:$0xff]
  %v174 = vld [vmem:[%s1 + $0x31c] sm:$0xf]
  %v175 = vld [vmem:[%s1 + $0x320] sm:$0xff]
  %v176 = vld [vmem:[%s1 + $0x328] sm:$0xff]
  %v177 = vld [vmem:[%s1 + $0x330] sm:$0xf]
  %v178 = vld [vmem:[%s1 + $0x334] sm:$0xff]
  %v179 = vld [vmem:[%s1 + $0x33c] sm:$0xff]
  %v180 = vld [vmem:[%s1 + $0x344] sm:$0xf]
  %v181 = vld [vmem:[%s1 + $0x348] sm:$0xff]
  %v182 = vld [vmem:[%s1 + $0x350] sm:$0xff]
  %v183 = vld [vmem:[%s1 + $0x358] sm:$0xf]
  %v184 = vld [vmem:[%s1 + $0x35c] sm:$0xff]
  %v185 = vld [vmem:[%s1 + $0x364] sm:$0xff]
  %v186 = vld [vmem:[%s1 + $0x36c] sm:$0xf]
  %v187 = vld [vmem:[%s1 + $0x370] sm:$0xff]
  %v188 = vld [vmem:[%s1 + $0x378] sm:$0xff]
  %v189 = vld [vmem:[%s1 + $0x380] sm:$0xf]
  %v190 = vld [vmem:[%s1 + $0x384] sm:$0xff]
  %v191 = vld [vmem:[%s1 + $0x38c] sm:$0xff]
  %v192 = vld [vmem:[%s1 + $0x394] sm:$0xf]
  %v193 = vld [vmem:[%s1 + $0x398] sm:$0xff]
  %v194 = vld [vmem:[%s1 + $0x3a0] sm:$0xff]
  %v195 = vld [vmem:[%s1 + $0x3a8] sm:$0xf]
  %v196 = vld [vmem:[%s1 + $0x3ac] sm:$0xff]
  %v197 = vld [vmem:[%s1 + $0x3b4] sm:$0xff]
  %v198 = vld [vmem:[%s1 + $0x3bc] sm:$0xf]
  %v199 = vld [vmem:[%s1 + $0x3c0] sm:$0xff]
  %v200 = vld [vmem:[%s1 + $0x3c8] sm:$0xff]
  %v201 = vld [vmem:[%s1 + $0x3d0] sm:$0xf]
  %v202 = vld [vmem:[%s1 + $0x3d4] sm:$0xff]
  %v203 = vld [vmem:[%s1 + $0x3dc] sm:$0xff]
  %v204 = vld [vmem:[%s1 + $0x3e4] sm:$0xf]
  %v205 = vld [vmem:[%s1 + $0x3e8] sm:$0xff]
  %v206 = vld [vmem:[%s1 + $0x3f0] sm:$0xff]
  %v207 = vld [vmem:[%s1 + $0x3f8] sm:$0xf]
  %v208 = vld [vmem:[%s1 + $0x3fc] sm:$0xff]
  %v209 = vld [vmem:[%s1 + $0x404] sm:$0xff]
  %v210 = vld [vmem:[%s1 + $0x40c] sm:$0xf]
  %v211 = vld [vmem:[%s1 + $0x410] sm:$0xff]
  %v212 = vld [vmem:[%s1 + $0x418] sm:$0xff]
  %v213 = vld [vmem:[%s1 + $0x420] sm:$0xf]
  %v214 = vld [vmem:[%s1 + $0x424] sm:$0xff]
  %v215 = vld [vmem:[%s1 + $0x42c] sm:$0xff]
  %v216 = vld [vmem:[%s1 + $0x434] sm:$0xf]
  %v217 = vld [vmem:[%s1 + $0x438] sm:$0xff]
  %v218 = vld [vmem:[%s1 + $0x440] sm:$0xff]
  %v219 = vld [vmem:[%s1 + $0x448] sm:$0xf]
  %v220 = vld [vmem:[%s1 + $0x44c] sm:$0xff]
  %v221 = vld [vmem:[%s1 + $0x454] sm:$0xff]
  %v222 = vld [vmem:[%s1 + $0x45c] sm:$0xf]
  %v223 = vld [vmem:[%s1 + $0x460] sm:$0xff]
  %v224 = vld [vmem:[%s1 + $0x468] sm:$0xff]
  %v225 = vld [vmem:[%s1 + $0x470] sm:$0xf]
  %v226 = vld [vmem:[%s1 + $0x474] sm:$0xff]
  %v227 = vld [vmem:[%s1 + $0x47c] sm:$0xff]
  %v228 = vld [vmem:[%s1 + $0x484] sm:$0xf]
  %v229 = vld [vmem:[%s1 + $0x488] sm:$0xff]
  %v230 = vld [vmem:[%s1 + $0x490] sm:$0xff]
  %v231 = vld [vmem:[%s1 + $0x498] sm:$0xf]
  %v232 = vld [vmem:[%s1 + $0x49c] sm:$0xff]
  %v233 = vld [vmem:[%s1 + $0x4a4] sm:$0xff]
  %v234 = vld [vmem:[%s1 + $0x4ac] sm:$0xf]
  %v235 = vld [vmem:[%s1 + $0x4b0] sm:$0xff]
  %v236 = vld [vmem:[%s1 + $0x4b8] sm:$0xff]
  %v237 = vld [vmem:[%s1 + $0x4c0] sm:$0xf]
  %v238 = vld [vmem:[%s1 + $0x4c4] sm:$0xff]
  %v239 = vld [vmem:[%s1 + $0x4cc] sm:$0xff]
  %v240 = vld [vmem:[%s1 + $0x4d4] sm:$0xf]
  %v241 = vld [vmem:[%s1 + $0x4d8] sm:$0xff]
  %v242 = vld [vmem:[%s1 + $0x4e0] sm:$0xff]
  %v243 = vld [vmem:[%s1 + $0x4e8] sm:$0xf]
  %v244 = vld [vmem:[%s1 + $0x4ec] sm:$0xff]
  %v245 = vld [vmem:[%s1 + $0x4f4] sm:$0xff]
  %v246 = vld [vmem:[%s1 + $0x4fc] sm:$0xf]
  %v247 = vld [vmem:[%s1 + $0x500] sm:$0xff]
  %v248 = vld [vmem:[%s1 + $0x508] sm:$0xff]
  %v249 = vld [vmem:[%s1 + $0x510] sm:$0xf]
  %v250 = vld [vmem:[%s1 + $0x514] sm:$0xff]
  %v251 = vld [vmem:[%s1 + $0x51c] sm:$0xff]
  %v252 = vld [vmem:[%s1 + $0x524] sm:$0xf]
  %v253 = vld [vmem:[%s1 + $0x528] sm:$0xff]
  %v254 = vld [vmem:[%s1 + $0x530] sm:$0xff]
  %v255 = vld [vmem:[%s1 + $0x538] sm:$0xf]
  %v256 = vld [vmem:[%s1 + $0x53c] sm:$0xff]
  %v257 = vld [vmem:[%s1 + $0x544] sm:$0xff]
  %v258 = vld [vmem:[%s1 + $0x54c] sm:$0xf]
  %v259 = vld [vmem:[%s1 + $0x550] sm:$0xff]
  %v260 = vld [vmem:[%s1 + $0x558] sm:$0xff]
  %v261 = vld [vmem:[%s1 + $0x560] sm:$0xf]
  %v262 = vld [vmem:[%s1 + $0x564] sm:$0xff]
  %v263 = vld [vmem:[%s1 + $0x56c] sm:$0xff]
  %v264 = vld [vmem:[%s1 + $0x574] sm:$0xf]
  %v265 = vld [vmem:[%s1 + $0x578] sm:$0xff]
  %v266 = vld [vmem:[%s1 + $0x580] sm:$0xff]
  %v267 = vld [vmem:[%s1 + $0x588] sm:$0xf]
  %v268 = vld [vmem:[%s1 + $0x58c] sm:$0xff]
  %v269 = vld [vmem:[%s1 + $0x594] sm:$0xff]
  %v270 = vld [vmem:[%s1 + $0x59c] sm:$0xf]
  %v271 = vld [vmem:[%s1 + $0x5a0] sm:$0xff]
  %v272 = vld [vmem:[%s1 + $0x5a8] sm:$0xff]
  %v273 = vld [vmem:[%s1 + $0x5b0] sm:$0xf]
  %v274 = vld [vmem:[%s1 + $0x5b4] sm:$0xff]
  %v275 = vld [vmem:[%s1 + $0x5bc] sm:$0xff]
  %v276 = vld [vmem:[%s1 + $0x5c4] sm:$0xf]
  %v277 = vld [vmem:[%s1 + $0x5c8] sm:$0xff]
  %v278 = vld [vmem:[%s1 + $0x5d0] sm:$0xff]
  %v279 = vld [vmem:[%s1 + $0x5d8] sm:$0xf]
  %v280 = vld [vmem:[%s1 + $0x5dc] sm:$0xff]
  %v281 = vld [vmem:[%s1 + $0x5e4] sm:$0xff]
  %v282 = vld [vmem:[%s1 + $0x5ec] sm:$0xf]
  %v283 = vld [vmem:[%s1 + $0x5f0] sm:$0xff]
  %v284 = vld [vmem:[%s1 + $0x5f8] sm:$0xff]
  %v285 = vld [vmem:[%s1 + $0x600] sm:$0xf]
  %v286 = vld [vmem:[%s1 + $0x604] sm:$0xff]
  %v287 = vld [vmem:[%s1 + $0x60c] sm:$0xff]
  %v288 = vld [vmem:[%s1 + $0x614] sm:$0xf]
  %v289 = vld [vmem:[%s1 + $0x618] sm:$0xff]
  %v290 = vld [vmem:[%s1 + $0x620] sm:$0xff]
  %v291 = vld [vmem:[%s1 + $0x628] sm:$0xf]
  %v292 = vld [vmem:[%s1 + $0x62c] sm:$0xff]
  %v293 = vld [vmem:[%s1 + $0x634] sm:$0xff]
  %v294 = vld [vmem:[%s1 + $0x63c] sm:$0xf]
  %v295 = vld [vmem:[%s1 + $0x640] sm:$0xff]
  %v296 = vld [vmem:[%s1 + $0x648] sm:$0xff]
  %v297 = vld [vmem:[%s1 + $0x650] sm:$0xf]
  %v298 = vld [vmem:[%s1 + $0x654] sm:$0xff]
  %v299 = vld [vmem:[%s1 + $0x65c] sm:$0xff]
  %v300 = vld [vmem:[%s1 + $0x664] sm:$0xf]
  %v301 = vld [vmem:[%s1 + $0x668] sm:$0xff]
  %v302 = vld [vmem:[%s1 + $0x670] sm:$0xff]
  %v303 = vld [vmem:[%s1 + $0x678] sm:$0xf]
  %v304 = vld [vmem:[%s1 + $0x67c] sm:$0xff]
  %v305 = vld [vmem:[%s1 + $0x684] sm:$0xff]
  %v306 = vld [vmem:[%s1 + $0x68c] sm:$0xf]
  %v307 = vld [vmem:[%s1 + $0x690] sm:$0xff]
  %v308 = vld [vmem:[%s1 + $0x698] sm:$0xff]
  %v309 = vld [vmem:[%s1 + $0x6a0] sm:$0xf]
  %v310 = vld [vmem:[%s1 + $0x6a4] sm:$0xff]
  %v311 = vld [vmem:[%s1 + $0x6ac] sm:$0xff]
  %v312 = vld [vmem:[%s1 + $0x6b4] sm:$0xf]
  %v313 = vld [vmem:[%s1 + $0x6b8] sm:$0xff]
  %v314 = vld [vmem:[%s1 + $0x6c0] sm:$0xff]
  %v315 = vld [vmem:[%s1 + $0x6c8] sm:$0xf]
  %v316 = vld [vmem:[%s1 + $0x6cc] sm:$0xff]
  %v317 = vld [vmem:[%s1 + $0x6d4] sm:$0xff]
  %v318 = vld [vmem:[%s1 + $0x6dc] sm:$0xf]
  %v319 = vld [vmem:[%s1 + $0x6e0] sm:$0xff]
  %v320 = vld [vmem:[%s1 + $0x6e8] sm:$0xff]
  %v321 = vld [vmem:[%s1 + $0x6f0] sm:$0xf]
  %v322 = vld [vmem:[%s1 + $0x6f4] sm:$0xff]
  %v323 = vld [vmem:[%s1 + $0x6fc] sm:$0xff]
  %v324 = vld [vmem:[%s1 + $0x704] sm:$0xf]
  %v325 = vld [vmem:[%s1 + $0x708] sm:$0xff]
  %v326 = vld [vmem:[%s1 + $0x710] sm:$0xff]
  %v327 = vld [vmem:[%s1 + $0x718] sm:$0xf]
  %v328 = vld [vmem:[%s1 + $0x71c] sm:$0xff]
  %v329 = vld [vmem:[%s1 + $0x724] sm:$0xff]
  %v330 = vld [vmem:[%s1 + $0x72c] sm:$0xf]
  %v331 = vld [vmem:[%s1 + $0x730] sm:$0xff]
  %v332 = vld [vmem:[%s1 + $0x738] sm:$0xff]
  %v333 = vld [vmem:[%s1 + $0x740] sm:$0xf]
  %v334 = vld [vmem:[%s1 + $0x744] sm:$0xff]
  %v335 = vld [vmem:[%s1 + $0x74c] sm:$0xff]
  %v336 = vld [vmem:[%s1 + $0x754] sm:$0xf]
  %v337 = vld [vmem:[%s1 + $0x758] sm:$0xff]
  %v338 = vld [vmem:[%s1 + $0x760] sm:$0xff]
  %v339 = vld [vmem:[%s1 + $0x768] sm:$0xf]
  %v340 = vld [vmem:[%s1 + $0x76c] sm:$0xff]
  %v341 = vld [vmem:[%s1 + $0x774] sm:$0xff]
  %v342 = vld [vmem:[%s1 + $0x77c] sm:$0xf]
  %v343 = vld [vmem:[%s1 + $0x780] sm:$0xff]
  %v344 = vld [vmem:[%s1 + $0x788] sm:$0xff]
  %v345 = vld [vmem:[%s1 + $0x790] sm:$0xf]
  %v346 = vld [vmem:[%s1 + $0x794] sm:$0xff]
  %v347 = vld [vmem:[%s1 + $0x79c] sm:$0xff]
  %v348 = vld [vmem:[%s1 + $0x7a4] sm:$0xf]
  %v349 = vld [vmem:[%s1 + $0x7a8] sm:$0xff]
  %v350 = vld [vmem:[%s1 + $0x7b0] sm:$0xff]
  %v351 = vld [vmem:[%s1 + $0x7b8] sm:$0xf]
  %v352 = vld [vmem:[%s1 + $0x7bc] sm:$0xff]
  %v353 = vld [vmem:[%s1 + $0x7c4] sm:$0xff]
  %v354 = vld [vmem:[%s1 + $0x7cc] sm:$0xf]
  %v355 = vld [vmem:[%s1 + $0x7d0] sm:$0xff]
  %v356 = vld [vmem:[%s1 + $0x7d8] sm:$0xff]
  %v357 = vld [vmem:[%s1 + $0x7e0] sm:$0xf]
  %v358 = vld [vmem:[%s1 + $0x7e4] sm:$0xff]
  %v359 = vld [vmem:[%s1 + $0x7ec] sm:$0xff]
  %v360 = vld [vmem:[%s1 + $0x7f4] sm:$0xf]
  %v361 = vld [vmem:[%s1 + $0x7f8] sm:$0xff]
  %v362 = vld [vmem:[%s1 + $0x800] sm:$0xff]
  %v363 = vld [vmem:[%s1 + $0x808] sm:$0xf]
  %v364 = vld [vmem:[%s1 + $0x80c] sm:$0xff]
  %v365 = vld [vmem:[%s1 + $0x814] sm:$0xff]
  %v366 = vld [vmem:[%s1 + $0x81c] sm:$0xf]
  %v367 = vld [vmem:[%s1 + $0x820] sm:$0xff]
  %v368 = vld [vmem:[%s1 + $0x828] sm:$0xff]
  %v369 = vld [vmem:[%s1 + $0x830] sm:$0xf]
  %v370 = vld [vmem:[%s1 + $0x834] sm:$0xff]
  %v371 = vld [vmem:[%s1 + $0x83c] sm:$0xff]
  %v372 = vld [vmem:[%s1 + $0x844] sm:$0xf]
  %v373 = vld [vmem:[%s1 + $0x848] sm:$0xff]
  %v374 = vld [vmem:[%s1 + $0x850] sm:$0xff]
  %v375 = vld [vmem:[%s1 + $0x858] sm:$0xf]
  %v376 = vld [vmem:[%s1 + $0x85c] sm:$0xff]
  %v377 = vld [vmem:[%s1 + $0x864] sm:$0xff]
  %v378 = vld [vmem:[%s1 + $0x86c] sm:$0xf]
  %v379 = vld [vmem:[%s1 + $0x870] sm:$0xff]
  %v380 = vld [vmem:[%s1 + $0x878] sm:$0xff]
  %v381 = vld [vmem:[%s1 + $0x880] sm:$0xf]
  %v382 = vld [vmem:[%s1 + $0x884] sm:$0xff]
  %v383 = vld [vmem:[%s1 + $0x88c] sm:$0xff]
  %v384 = vld [vmem:[%s1 + $0x894] sm:$0xf]
  %v385 = vld [vmem:[%s1 + $0x898] sm:$0xff]
  %v386 = vld [vmem:[%s1 + $0x8a0] sm:$0xff]
  %v387 = vld [vmem:[%s1 + $0x8a8] sm:$0xf]
  %v388 = vld [vmem:[%s1 + $0x8ac] sm:$0xff]
  %v389 = vld [vmem:[%s1 + $0x8b4] sm:$0xff]
  %v390 = vld [vmem:[%s1 + $0x8bc] sm:$0xf]
  %v391 = vld [vmem:[%s2] sm:$0x1f]
  %v393 = vlaneseq
  %v394 = vshrl.u32 %v393, 7
  %v395 = vsub.s32 0, %v394
  %v396 = vrot.slane %v391, %v395
  %v397 = vlaneseq
  %v398 = vshrl.u32 %v397, 7
  %v399 = vsub.s32 1, %v398
  %v400 = vrot.slane %v391, %v399
  %v401 = vlaneseq
  %v402 = vshrl.u32 %v401, 7
  %v403 = vsub.s32 2, %v402
  %v404 = vrot.slane %v391, %v403
  %v405 = vlaneseq
  %v406 = vshrl.u32 %v405, 7
  %v407 = vsub.s32 3, %v406
  %v408 = vrot.slane %v391, %v407
  %v409 = vlaneseq
  %v410 = vshrl.u32 %v409, 7
  %v411 = vsub.s32 4, %v410
  %v412 = vrot.slane %v391, %v411
  %v754 = vunpack.c.l.b16 %v55
  %v755 = vunpack.c.h.b16 %v55
  %v756 = vunpack.c.l.b16 %v56
  %v757 = vunpack.c.h.b16 %v56
  %v758 = vunpack.c.l.b16 %v57
  %v759 = vunpack.c.l.b16 %v58
  %v760 = vunpack.c.h.b16 %v58
  %v761 = vunpack.c.l.b16 %v59
  %v762 = vunpack.c.h.b16 %v59
  %v763 = vunpack.c.l.b16 %v60
  %v764 = vunpack.c.l.b16 %v61
  %v765 = vunpack.c.h.b16 %v61
  %v766 = vunpack.c.l.b16 %v62
  %v767 = vunpack.c.h.b16 %v62
  %v768 = vunpack.c.l.b16 %v63
  %v769 = vunpack.c.l.b16 %v64
  %v770 = vunpack.c.h.b16 %v64
  %v771 = vunpack.c.l.b16 %v65
  %v772 = vunpack.c.h.b16 %v65
  %v773 = vunpack.c.l.b16 %v66
  %v774 = vunpack.c.l.b16 %v67
  %v775 = vunpack.c.h.b16 %v67
  %v776 = vunpack.c.l.b16 %v68
  %v777 = vunpack.c.h.b16 %v68
  %v778 = vunpack.c.l.b16 %v69
  %v779 = vunpack.c.l.b16 %v70
  %v780 = vunpack.c.h.b16 %v70
  %v781 = vunpack.c.l.b16 %v71
  %v782 = vunpack.c.h.b16 %v71
  %v783 = vunpack.c.l.b16 %v72
  %v784 = vunpack.c.l.b16 %v73
  %v785 = vunpack.c.h.b16 %v73
  %v786 = vunpack.c.l.b16 %v74
  %v787 = vunpack.c.h.b16 %v74
  %v788 = vunpack.c.l.b16 %v75
  %v789 = vunpack.c.l.b16 %v76
  %v790 = vunpack.c.h.b16 %v76
  %v791 = vunpack.c.l.b16 %v77
  %v792 = vunpack.c.h.b16 %v77
  %v793 = vunpack.c.l.b16 %v78
  %v794 = vunpack.c.l.b16 %v79
  %v795 = vunpack.c.h.b16 %v79
  %v796 = vunpack.c.l.b16 %v80
  %v797 = vunpack.c.h.b16 %v80
  %v798 = vunpack.c.l.b16 %v81
  %v799 = vunpack.c.l.b16 %v82
  %v800 = vunpack.c.h.b16 %v82
  %v801 = vunpack.c.l.b16 %v83
  %v802 = vunpack.c.h.b16 %v83
  %v803 = vunpack.c.l.b16 %v84
  %v804 = vunpack.c.l.b16 %v85
  %v805 = vunpack.c.h.b16 %v85
  %v806 = vunpack.c.l.b16 %v86
  %v807 = vunpack.c.h.b16 %v86
  %v808 = vunpack.c.l.b16 %v87
  %v809 = vunpack.c.l.b16 %v88
  %v810 = vunpack.c.h.b16 %v88
  %v811 = vunpack.c.l.b16 %v89
  %v812 = vunpack.c.h.b16 %v89
  %v813 = vunpack.c.l.b16 %v90
  %v814 = vunpack.c.l.b16 %v91
  %v815 = vunpack.c.h.b16 %v91
  %v816 = vunpack.c.l.b16 %v92
  %v817 = vunpack.c.h.b16 %v92
  %v818 = vunpack.c.l.b16 %v93
  %v819 = vunpack.c.l.b16 %v94
  %v820 = vunpack.c.h.b16 %v94
  %v821 = vunpack.c.l.b16 %v95
  %v822 = vunpack.c.h.b16 %v95
  %v823 = vunpack.c.l.b16 %v96
  %v824 = vunpack.c.l.b16 %v97
  %v825 = vunpack.c.h.b16 %v97
  %v826 = vunpack.c.l.b16 %v98
  %v827 = vunpack.c.h.b16 %v98
  %v828 = vunpack.c.l.b16 %v99
  %v829 = vunpack.c.l.b16 %v100
  %v830 = vunpack.c.h.b16 %v100
  %v831 = vunpack.c.l.b16 %v101
  %v832 = vunpack.c.h.b16 %v101
  %v833 = vunpack.c.l.b16 %v102
  %v834 = vunpack.c.l.b16 %v103
  %v835 = vunpack.c.h.b16 %v103
  %v836 = vunpack.c.l.b16 %v104
  %v837 = vunpack.c.h.b16 %v104
  %v838 = vunpack.c.l.b16 %v105
  %v839 = vunpack.c.l.b16 %v106
  %v840 = vunpack.c.h.b16 %v106
  %v841 = vunpack.c.l.b16 %v107
  %v842 = vunpack.c.h.b16 %v107
  %v843 = vunpack.c.l.b16 %v108
  %v844 = vunpack.c.l.b16 %v109
  %v845 = vunpack.c.h.b16 %v109
  %v846 = vunpack.c.l.b16 %v110
  %v847 = vunpack.c.h.b16 %v110
  %v848 = vunpack.c.l.b16 %v111
  %v849 = vunpack.c.l.b16 %v112
  %v850 = vunpack.c.h.b16 %v112
  %v851 = vunpack.c.l.b16 %v113
  %v852 = vunpack.c.h.b16 %v113
  %v853 = vunpack.c.l.b16 %v114
  %v854 = vunpack.c.l.b16 %v115
  %v855 = vunpack.c.h.b16 %v115
  %v856 = vunpack.c.l.b16 %v116
  %v857 = vunpack.c.h.b16 %v116
  %v858 = vunpack.c.l.b16 %v117
  %v859 = vunpack.c.l.b16 %v118
  %v860 = vunpack.c.h.b16 %v118
  %v861 = vunpack.c.l.b16 %v119
  %v862 = vunpack.c.h.b16 %v119
  %v863 = vunpack.c.l.b16 %v120
  %v864 = vunpack.c.l.b16 %v121
  %v865 = vunpack.c.h.b16 %v121
  %v866 = vunpack.c.l.b16 %v122
  %v867 = vunpack.c.h.b16 %v122
  %v868 = vunpack.c.l.b16 %v123
  %v869 = vunpack.c.l.b16 %v124
  %v870 = vunpack.c.h.b16 %v124
  %v871 = vunpack.c.l.b16 %v125
  %v872 = vunpack.c.h.b16 %v125
  %v873 = vunpack.c.l.b16 %v126
  %v874 = vunpack.c.l.b16 %v127
  %v875 = vunpack.c.h.b16 %v127
  %v876 = vunpack.c.l.b16 %v128
  %v877 = vunpack.c.h.b16 %v128
  %v878 = vunpack.c.l.b16 %v129
  %v879 = vunpack.c.l.b16 %v130
  %v880 = vunpack.c.h.b16 %v130
  %v881 = vunpack.c.l.b16 %v131
  %v882 = vunpack.c.h.b16 %v131
  %v883 = vunpack.c.l.b16 %v132
  %v884 = vunpack.c.l.b16 %v133
  %v885 = vunpack.c.h.b16 %v133
  %v886 = vunpack.c.l.b16 %v134
  %v887 = vunpack.c.h.b16 %v134
  %v888 = vunpack.c.l.b16 %v135
  %v889 = vunpack.c.l.b16 %v136
  %v890 = vunpack.c.h.b16 %v136
  %v891 = vunpack.c.l.b16 %v137
  %v892 = vunpack.c.h.b16 %v137
  %v893 = vunpack.c.l.b16 %v138
  %v894 = vunpack.c.l.b16 %v139
  %v895 = vunpack.c.h.b16 %v139
  %v896 = vunpack.c.l.b16 %v140
  %v897 = vunpack.c.h.b16 %v140
  %v898 = vunpack.c.l.b16 %v141
  %v899 = vunpack.c.l.b16 %v142
  %v900 = vunpack.c.h.b16 %v142
  %v901 = vunpack.c.l.b16 %v143
  %v902 = vunpack.c.h.b16 %v143
  %v903 = vunpack.c.l.b16 %v144
  %v904 = vunpack.c.l.b16 %v145
  %v905 = vunpack.c.h.b16 %v145
  %v906 = vunpack.c.l.b16 %v146
  %v907 = vunpack.c.h.b16 %v146
  %v908 = vunpack.c.l.b16 %v147
  %v909 = vunpack.c.l.b16 %v148
  %v910 = vunpack.c.h.b16 %v148
  %v911 = vunpack.c.l.b16 %v149
  %v912 = vunpack.c.h.b16 %v149
  %v913 = vunpack.c.l.b16 %v150
  %v914 = vunpack.c.l.b16 %v151
  %v915 = vunpack.c.h.b16 %v151
  %v916 = vunpack.c.l.b16 %v152
  %v917 = vunpack.c.h.b16 %v152
  %v918 = vunpack.c.l.b16 %v153
  %v919 = vunpack.c.l.b16 %v154
  %v920 = vunpack.c.h.b16 %v154
  %v921 = vunpack.c.l.b16 %v155
  %v922 = vunpack.c.h.b16 %v155
  %v923 = vunpack.c.l.b16 %v156
  %v924 = vunpack.c.l.b16 %v157
  %v925 = vunpack.c.h.b16 %v157
  %v926 = vunpack.c.l.b16 %v158
  %v927 = vunpack.c.h.b16 %v158
  %v928 = vunpack.c.l.b16 %v159
  %v929 = vunpack.c.l.b16 %v160
  %v930 = vunpack.c.h.b16 %v160
  %v931 = vunpack.c.l.b16 %v161
  %v932 = vunpack.c.h.b16 %v161
  %v933 = vunpack.c.l.b16 %v162
  %v934 = vunpack.c.l.b16 %v163
  %v935 = vunpack.c.h.b16 %v163
  %v936 = vunpack.c.l.b16 %v164
  %v937 = vunpack.c.h.b16 %v164
  %v938 = vunpack.c.l.b16 %v165
  %v939 = vunpack.c.l.b16 %v166
  %v940 = vunpack.c.h.b16 %v166
  %v941 = vunpack.c.l.b16 %v167
  %v942 = vunpack.c.h.b16 %v167
  %v943 = vunpack.c.l.b16 %v168
  %v944 = vunpack.c.l.b16 %v169
  %v945 = vunpack.c.h.b16 %v169
  %v946 = vunpack.c.l.b16 %v170
  %v947 = vunpack.c.h.b16 %v170
  %v948 = vunpack.c.l.b16 %v171
  %v949 = vunpack.c.l.b16 %v172
  %v950 = vunpack.c.h.b16 %v172
  %v951 = vunpack.c.l.b16 %v173
  %v952 = vunpack.c.h.b16 %v173
  %v953 = vunpack.c.l.b16 %v174
  %v954 = vunpack.c.l.b16 %v175
  %v955 = vunpack.c.h.b16 %v175
  %v956 = vunpack.c.l.b16 %v176
  %v957 = vunpack.c.h.b16 %v176
  %v958 = vunpack.c.l.b16 %v177
  %v959 = vunpack.c.l.b16 %v178
  %v960 = vunpack.c.h.b16 %v178
  %v961 = vunpack.c.l.b16 %v179
  %v962 = vunpack.c.h.b16 %v179
  %v963 = vunpack.c.l.b16 %v180
  %v964 = vunpack.c.l.b16 %v181
  %v965 = vunpack.c.h.b16 %v181
  %v966 = vunpack.c.l.b16 %v182
  %v967 = vunpack.c.h.b16 %v182
  %v968 = vunpack.c.l.b16 %v183
  %v969 = vunpack.c.l.b16 %v184
  %v970 = vunpack.c.h.b16 %v184
  %v971 = vunpack.c.l.b16 %v185
  %v972 = vunpack.c.h.b16 %v185
  %v973 = vunpack.c.l.b16 %v186
  %v974 = vunpack.c.l.b16 %v187
  %v975 = vunpack.c.h.b16 %v187
  %v976 = vunpack.c.l.b16 %v188
  %v977 = vunpack.c.h.b16 %v188
  %v978 = vunpack.c.l.b16 %v189
  %v979 = vunpack.c.l.b16 %v190
  %v980 = vunpack.c.h.b16 %v190
  %v981 = vunpack.c.l.b16 %v191
  %v982 = vunpack.c.h.b16 %v191
  %v983 = vunpack.c.l.b16 %v192
  %v984 = vunpack.c.l.b16 %v193
  %v985 = vunpack.c.h.b16 %v193
  %v986 = vunpack.c.l.b16 %v194
  %v987 = vunpack.c.h.b16 %v194
  %v988 = vunpack.c.l.b16 %v195
  %v989 = vunpack.c.l.b16 %v196
  %v990 = vunpack.c.h.b16 %v196
  %v991 = vunpack.c.l.b16 %v197
  %v992 = vunpack.c.h.b16 %v197
  %v993 = vunpack.c.l.b16 %v198
  %v994 = vunpack.c.l.b16 %v199
  %v995 = vunpack.c.h.b16 %v199
  %v996 = vunpack.c.l.b16 %v200
  %v997 = vunpack.c.h.b16 %v200
  %v998 = vunpack.c.l.b16 %v201
  %v999 = vunpack.c.l.b16 %v202
  %v1000 = vunpack.c.h.b16 %v202
  %v1001 = vunpack.c.l.b16 %v203
  %v1002 = vunpack.c.h.b16 %v203
  %v1003 = vunpack.c.l.b16 %v204
  %v1004 = vunpack.c.l.b16 %v205
  %v1005 = vunpack.c.h.b16 %v205
  %v1006 = vunpack.c.l.b16 %v206
  %v1007 = vunpack.c.h.b16 %v206
  %v1008 = vunpack.c.l.b16 %v207
  %v1009 = vunpack.c.l.b16 %v208
  %v1010 = vunpack.c.h.b16 %v208
  %v1011 = vunpack.c.l.b16 %v209
  %v1012 = vunpack.c.h.b16 %v209
  %v1013 = vunpack.c.l.b16 %v210
  %v1014 = vunpack.c.l.b16 %v211
  %v1015 = vunpack.c.h.b16 %v211
  %v1016 = vunpack.c.l.b16 %v212
  %v1017 = vunpack.c.h.b16 %v212
  %v1018 = vunpack.c.l.b16 %v213
  %v1019 = vunpack.c.l.b16 %v214
  %v1020 = vunpack.c.h.b16 %v214
  %v1021 = vunpack.c.l.b16 %v215
  %v1022 = vunpack.c.h.b16 %v215
  %v1023 = vunpack.c.l.b16 %v216
  %v1024 = vunpack.c.l.b16 %v217
  %v1025 = vunpack.c.h.b16 %v217
  %v1026 = vunpack.c.l.b16 %v218
  %v1027 = vunpack.c.h.b16 %v218
  %v1028 = vunpack.c.l.b16 %v219
  %v1029 = vunpack.c.l.b16 %v220
  %v1030 = vunpack.c.h.b16 %v220
  %v1031 = vunpack.c.l.b16 %v221
  %v1032 = vunpack.c.h.b16 %v221
  %v1033 = vunpack.c.l.b16 %v222
  %v1034 = vunpack.c.l.b16 %v223
  %v1035 = vunpack.c.h.b16 %v223
  %v1036 = vunpack.c.l.b16 %v224
  %v1037 = vunpack.c.h.b16 %v224
  %v1038 = vunpack.c.l.b16 %v225
  %v1039 = vunpack.c.l.b16 %v226
  %v1040 = vunpack.c.h.b16 %v226
  %v1041 = vunpack.c.l.b16 %v227
  %v1042 = vunpack.c.h.b16 %v227
  %v1043 = vunpack.c.l.b16 %v228
  %v1044 = vunpack.c.l.b16 %v229
  %v1045 = vunpack.c.h.b16 %v229
  %v1046 = vunpack.c.l.b16 %v230
  %v1047 = vunpack.c.h.b16 %v230
  %v1048 = vunpack.c.l.b16 %v231
  %v1049 = vunpack.c.l.b16 %v232
  %v1050 = vunpack.c.h.b16 %v232
  %v1051 = vunpack.c.l.b16 %v233
  %v1052 = vunpack.c.h.b16 %v233
  %v1053 = vunpack.c.l.b16 %v234
  %v1054 = vunpack.c.l.b16 %v235
  %v1055 = vunpack.c.h.b16 %v235
  %v1056 = vunpack.c.l.b16 %v236
  %v1057 = vunpack.c.h.b16 %v236
  %v1058 = vunpack.c.l.b16 %v237
  %v1059 = vunpack.c.l.b16 %v238
  %v1060 = vunpack.c.h.b16 %v238
  %v1061 = vunpack.c.l.b16 %v239
  %v1062 = vunpack.c.h.b16 %v239
  %v1063 = vunpack.c.l.b16 %v240
  %v1064 = vunpack.c.l.b16 %v241
  %v1065 = vunpack.c.h.b16 %v241
  %v1066 = vunpack.c.l.b16 %v242
  %v1067 = vunpack.c.h.b16 %v242
  %v1068 = vunpack.c.l.b16 %v243
  %v1069 = vunpack.c.l.b16 %v244
  %v1070 = vunpack.c.h.b16 %v244
  %v1071 = vunpack.c.l.b16 %v245
  %v1072 = vunpack.c.h.b16 %v245
  %v1073 = vunpack.c.l.b16 %v246
  %v1074 = vunpack.c.l.b16 %v247
  %v1075 = vunpack.c.h.b16 %v247
  %v1076 = vunpack.c.l.b16 %v248
  %v1077 = vunpack.c.h.b16 %v248
  %v1078 = vunpack.c.l.b16 %v249
  %v1079 = vunpack.c.l.b16 %v250
  %v1080 = vunpack.c.h.b16 %v250
  %v1081 = vunpack.c.l.b16 %v251
  %v1082 = vunpack.c.h.b16 %v251
  %v1083 = vunpack.c.l.b16 %v252
  %v1084 = vunpack.c.l.b16 %v253
  %v1085 = vunpack.c.h.b16 %v253
  %v1086 = vunpack.c.l.b16 %v254
  %v1087 = vunpack.c.h.b16 %v254
  %v1088 = vunpack.c.l.b16 %v255
  %v1089 = vunpack.c.l.b16 %v256
  %v1090 = vunpack.c.h.b16 %v256
  %v1091 = vunpack.c.l.b16 %v257
  %v1092 = vunpack.c.h.b16 %v257
  %v1093 = vunpack.c.l.b16 %v258
  %v1094 = vunpack.c.l.b16 %v259
  %v1095 = vunpack.c.h.b16 %v259
  %v1096 = vunpack.c.l.b16 %v260
  %v1097 = vunpack.c.h.b16 %v260
  %v1098 = vunpack.c.l.b16 %v261
  %v1099 = vunpack.c.l.b16 %v262
  %v1100 = vunpack.c.h.b16 %v262
  %v1101 = vunpack.c.l.b16 %v263
  %v1102 = vunpack.c.h.b16 %v263
  %v1103 = vunpack.c.l.b16 %v264
  %v1104 = vunpack.c.l.b16 %v265
  %v1105 = vunpack.c.h.b16 %v265
  %v1106 = vunpack.c.l.b16 %v266
  %v1107 = vunpack.c.h.b16 %v266
  %v1108 = vunpack.c.l.b16 %v267
  %v1109 = vunpack.c.l.b16 %v268
  %v1110 = vunpack.c.h.b16 %v268
  %v1111 = vunpack.c.l.b16 %v269
  %v1112 = vunpack.c.h.b16 %v269
  %v1113 = vunpack.c.l.b16 %v270
  %v1114 = vunpack.c.l.b16 %v271
  %v1115 = vunpack.c.h.b16 %v271
  %v1116 = vunpack.c.l.b16 %v272
  %v1117 = vunpack.c.h.b16 %v272
  %v1118 = vunpack.c.l.b16 %v273
  %v1119 = vunpack.c.l.b16 %v274
  %v1120 = vunpack.c.h.b16 %v274
  %v1121 = vunpack.c.l.b16 %v275
  %v1122 = vunpack.c.h.b16 %v275
  %v1123 = vunpack.c.l.b16 %v276
  %v1124 = vunpack.c.l.b16 %v277
  %v1125 = vunpack.c.h.b16 %v277
  %v1126 = vunpack.c.l.b16 %v278
  %v1127 = vunpack.c.h.b16 %v278
  %v1128 = vunpack.c.l.b16 %v279
  %v1129 = vunpack.c.l.b16 %v280
  %v1130 = vunpack.c.h.b16 %v280
  %v1131 = vunpack.c.l.b16 %v281
  %v1132 = vunpack.c.h.b16 %v281
  %v1133 = vunpack.c.l.b16 %v282
  %v1134 = vunpack.c.l.b16 %v283
  %v1135 = vunpack.c.h.b16 %v283
  %v1136 = vunpack.c.l.b16 %v284
  %v1137 = vunpack.c.h.b16 %v284
  %v1138 = vunpack.c.l.b16 %v285
  %v1139 = vunpack.c.l.b16 %v286
  %v1140 = vunpack.c.h.b16 %v286
  %v1141 = vunpack.c.l.b16 %v287
  %v1142 = vunpack.c.h.b16 %v287
  %v1143 = vunpack.c.l.b16 %v288
  %v1144 = vunpack.c.l.b16 %v289
  %v1145 = vunpack.c.h.b16 %v289
  %v1146 = vunpack.c.l.b16 %v290
  %v1147 = vunpack.c.h.b16 %v290
  %v1148 = vunpack.c.l.b16 %v291
  %v1149 = vunpack.c.l.b16 %v292
  %v1150 = vunpack.c.h.b16 %v292
  %v1151 = vunpack.c.l.b16 %v293
  %v1152 = vunpack.c.h.b16 %v293
  %v1153 = vunpack.c.l.b16 %v294
  %v1154 = vunpack.c.l.b16 %v295
  %v1155 = vunpack.c.h.b16 %v295
  %v1156 = vunpack.c.l.b16 %v296
  %v1157 = vunpack.c.h.b16 %v296
  %v1158 = vunpack.c.l.b16 %v297
  %v1159 = vunpack.c.l.b16 %v298
  %v1160 = vunpack.c.h.b16 %v298
  %v1161 = vunpack.c.l.b16 %v299
  %v1162 = vunpack.c.h.b16 %v299
  %v1163 = vunpack.c.l.b16 %v300
  %v1164 = vunpack.c.l.b16 %v301
  %v1165 = vunpack.c.h.b16 %v301
  %v1166 = vunpack.c.l.b16 %v302
  %v1167 = vunpack.c.h.b16 %v302
  %v1168 = vunpack.c.l.b16 %v303
  %v1169 = vunpack.c.l.b16 %v304
  %v1170 = vunpack.c.h.b16 %v304
  %v1171 = vunpack.c.l.b16 %v305
  %v1172 = vunpack.c.h.b16 %v305
  %v1173 = vunpack.c.l.b16 %v306
  %v1174 = vunpack.c.l.b16 %v307
  %v1175 = vunpack.c.h.b16 %v307
  %v1176 = vunpack.c.l.b16 %v308
  %v1177 = vunpack.c.h.b16 %v308
  %v1178 = vunpack.c.l.b16 %v309
  %v1179 = vunpack.c.l.b16 %v310
  %v1180 = vunpack.c.h.b16 %v310
  %v1181 = vunpack.c.l.b16 %v311
  %v1182 = vunpack.c.h.b16 %v311
  %v1183 = vunpack.c.l.b16 %v312
  %v1184 = vunpack.c.l.b16 %v313
  %v1185 = vunpack.c.h.b16 %v313
  %v1186 = vunpack.c.l.b16 %v314
  %v1187 = vunpack.c.h.b16 %v314
  %v1188 = vunpack.c.l.b16 %v315
  %v1189 = vunpack.c.l.b16 %v316
  %v1190 = vunpack.c.h.b16 %v316
  %v1191 = vunpack.c.l.b16 %v317
  %v1192 = vunpack.c.h.b16 %v317
  %v1193 = vunpack.c.l.b16 %v318
  %v1194 = vunpack.c.l.b16 %v319
  %v1195 = vunpack.c.h.b16 %v319
  %v1196 = vunpack.c.l.b16 %v320
  %v1197 = vunpack.c.h.b16 %v320
  %v1198 = vunpack.c.l.b16 %v321
  %v1199 = vunpack.c.l.b16 %v322
  %v1200 = vunpack.c.h.b16 %v322
  %v1201 = vunpack.c.l.b16 %v323
  %v1202 = vunpack.c.h.b16 %v323
  %v1203 = vunpack.c.l.b16 %v324
  %v1204 = vunpack.c.l.b16 %v325
  %v1205 = vunpack.c.h.b16 %v325
  %v1206 = vunpack.c.l.b16 %v326
  %v1207 = vunpack.c.h.b16 %v326
  %v1208 = vunpack.c.l.b16 %v327
  %v1209 = vunpack.c.l.b16 %v328
  %v1210 = vunpack.c.h.b16 %v328
  %v1211 = vunpack.c.l.b16 %v329
  %v1212 = vunpack.c.h.b16 %v329
  %v1213 = vunpack.c.l.b16 %v330
  %v1214 = vunpack.c.l.b16 %v331
  %v1215 = vunpack.c.h.b16 %v331
  %v1216 = vunpack.c.l.b16 %v332
  %v1217 = vunpack.c.h.b16 %v332
  %v1218 = vunpack.c.l.b16 %v333
  %v1219 = vunpack.c.l.b16 %v334
  %v1220 = vunpack.c.h.b16 %v334
  %v1221 = vunpack.c.l.b16 %v335
  %v1222 = vunpack.c.h.b16 %v335
  %v1223 = vunpack.c.l.b16 %v336
  %v1224 = vunpack.c.l.b16 %v337
  %v1225 = vunpack.c.h.b16 %v337
  %v1226 = vunpack.c.l.b16 %v338
  %v1227 = vunpack.c.h.b16 %v338
  %v1228 = vunpack.c.l.b16 %v339
  %v1229 = vunpack.c.l.b16 %v340
  %v1230 = vunpack.c.h.b16 %v340
  %v1231 = vunpack.c.l.b16 %v341
  %v1232 = vunpack.c.h.b16 %v341
  %v1233 = vunpack.c.l.b16 %v342
  %v1234 = vunpack.c.l.b16 %v343
  %v1235 = vunpack.c.h.b16 %v343
  %v1236 = vunpack.c.l.b16 %v344
  %v1237 = vunpack.c.h.b16 %v344
  %v1238 = vunpack.c.l.b16 %v345
  %v1239 = vunpack.c.l.b16 %v346
  %v1240 = vunpack.c.h.b16 %v346
  %v1241 = vunpack.c.l.b16 %v347
  %v1242 = vunpack.c.h.b16 %v347
  %v1243 = vunpack.c.l.b16 %v348
  %v1244 = vunpack.c.l.b16 %v349
  %v1245 = vunpack.c.h.b16 %v349
  %v1246 = vunpack.c.l.b16 %v350
  %v1247 = vunpack.c.h.b16 %v350
  %v1248 = vunpack.c.l.b16 %v351
  %v1249 = vunpack.c.l.b16 %v352
  %v1250 = vunpack.c.h.b16 %v352
  %v1251 = vunpack.c.l.b16 %v353
  %v1252 = vunpack.c.h.b16 %v353
  %v1253 = vunpack.c.l.b16 %v354
  %v1254 = vunpack.c.l.b16 %v355
  %v1255 = vunpack.c.h.b16 %v355
  %v1256 = vunpack.c.l.b16 %v356
  %v1257 = vunpack.c.h.b16 %v356
  %v1258 = vunpack.c.l.b16 %v357
  %v1259 = vunpack.c.l.b16 %v358
  %v1260 = vunpack.c.h.b16 %v358
  %v1261 = vunpack.c.l.b16 %v359
  %v1262 = vunpack.c.h.b16 %v359
  %v1263 = vunpack.c.l.b16 %v360
  %v1264 = vunpack.c.l.b16 %v361
  %v1265 = vunpack.c.h.b16 %v361
  %v1266 = vunpack.c.l.b16 %v362
  %v1267 = vunpack.c.h.b16 %v362
  %v1268 = vunpack.c.l.b16 %v363
  %v1269 = vunpack.c.l.b16 %v364
  %v1270 = vunpack.c.h.b16 %v364
  %v1271 = vunpack.c.l.b16 %v365
  %v1272 = vunpack.c.h.b16 %v365
  %v1273 = vunpack.c.l.b16 %v366
  %v1274 = vunpack.c.l.b16 %v367
  %v1275 = vunpack.c.h.b16 %v367
  %v1276 = vunpack.c.l.b16 %v368
  %v1277 = vunpack.c.h.b16 %v368
  %v1278 = vunpack.c.l.b16 %v369
  %v1279 = vunpack.c.l.b16 %v370
  %v1280 = vunpack.c.h.b16 %v370
  %v1281 = vunpack.c.l.b16 %v371
  %v1282 = vunpack.c.h.b16 %v371
  %v1283 = vunpack.c.l.b16 %v372
  %v1284 = vunpack.c.l.b16 %v373
  %v1285 = vunpack.c.h.b16 %v373
  %v1286 = vunpack.c.l.b16 %v374
  %v1287 = vunpack.c.h.b16 %v374
  %v1288 = vunpack.c.l.b16 %v375
  %v1289 = vunpack.c.l.b16 %v376
  %v1290 = vunpack.c.h.b16 %v376
  %v1291 = vunpack.c.l.b16 %v377
  %v1292 = vunpack.c.h.b16 %v377
  %v1293 = vunpack.c.l.b16 %v378
  %v1294 = vunpack.c.l.b16 %v379
  %v1295 = vunpack.c.h.b16 %v379
  %v1296 = vunpack.c.l.b16 %v380
  %v1297 = vunpack.c.h.b16 %v380
  %v1298 = vunpack.c.l.b16 %v381
  %v1299 = vunpack.c.l.b16 %v382
  %v1300 = vunpack.c.h.b16 %v382
  %v1301 = vunpack.c.l.b16 %v383
  %v1302 = vunpack.c.h.b16 %v383
  %v1303 = vunpack.c.l.b16 %v384
  %v1304 = vunpack.c.l.b16 %v385
  %v1305 = vunpack.c.h.b16 %v385
  %v1306 = vunpack.c.l.b16 %v386
  %v1307 = vunpack.c.h.b16 %v386
  %v1308 = vunpack.c.l.b16 %v387
  %v1309 = vunpack.c.l.b16 %v388
  %v1310 = vunpack.c.h.b16 %v388
  %v1311 = vunpack.c.l.b16 %v389
  %v1312 = vunpack.c.h.b16 %v389
  %v1313 = vunpack.c.l.b16 %v390
  %v1314 = vpack.c.b16 %v759, %v754
  %v1315 = vpack.c.b16 %v760, %v755
  %v1316 = vpack.c.b16 %v761, %v756
  %v1317 = vpack.c.b16 %v762, %v757
  %v1318 = vpack.c.b16 %v763, %v758
  %v1319 = vpack.c.b16 %v769, %v764
  %v1320 = vpack.c.b16 %v770, %v765
  %v1321 = vpack.c.b16 %v771, %v766
  %v1322 = vpack.c.b16 %v772, %v767
  %v1323 = vpack.c.b16 %v773, %v768
  %v1324 = vpack.c.b16 %v779, %v774
  %v1325 = vpack.c.b16 %v780, %v775
  %v1326 = vpack.c.b16 %v781, %v776
  %v1327 = vpack.c.b16 %v782, %v777
  %v1328 = vpack.c.b16 %v783, %v778
  %v1329 = vpack.c.b16 %v789, %v784
  %v1330 = vpack.c.b16 %v790, %v785
  %v1331 = vpack.c.b16 %v791, %v786
  %v1332 = vpack.c.b16 %v792, %v787
  %v1333 = vpack.c.b16 %v793, %v788
  %v1334 = vpack.c.b16 %v799, %v794
  %v1335 = vpack.c.b16 %v800, %v795
  %v1336 = vpack.c.b16 %v801, %v796
  %v1337 = vpack.c.b16 %v802, %v797
  %v1338 = vpack.c.b16 %v803, %v798
  %v1339 = vpack.c.b16 %v809, %v804
  %v1340 = vpack.c.b16 %v810, %v805
  %v1341 = vpack.c.b16 %v811, %v806
  %v1342 = vpack.c.b16 %v812, %v807
  %v1343 = vpack.c.b16 %v813, %v808
  %v1344 = vpack.c.b16 %v819, %v814
  %v1345 = vpack.c.b16 %v820, %v815
  %v1346 = vpack.c.b16 %v821, %v816
  %v1347 = vpack.c.b16 %v822, %v817
  %v1348 = vpack.c.b16 %v823, %v818
  %v1349 = vpack.c.b16 %v829, %v824
  %v1350 = vpack.c.b16 %v830, %v825
  %v1351 = vpack.c.b16 %v831, %v826
  %v1352 = vpack.c.b16 %v832, %v827
  %v1353 = vpack.c.b16 %v833, %v828
  %v1354 = vpack.c.b16 %v839, %v834
  %v1355 = vpack.c.b16 %v840, %v835
  %v1356 = vpack.c.b16 %v841, %v836
  %v1357 = vpack.c.b16 %v842, %v837
  %v1358 = vpack.c.b16 %v843, %v838
  %v1359 = vpack.c.b16 %v849, %v844
  %v1360 = vpack.c.b16 %v850, %v845
  %v1361 = vpack.c.b16 %v851, %v846
  %v1362 = vpack.c.b16 %v852, %v847
  %v1363 = vpack.c.b16 %v853, %v848
  %v1364 = vpack.c.b16 %v859, %v854
  %v1365 = vpack.c.b16 %v860, %v855
  %v1366 = vpack.c.b16 %v861, %v856
  %v1367 = vpack.c.b16 %v862, %v857
  %v1368 = vpack.c.b16 %v863, %v858
  %v1369 = vpack.c.b16 %v869, %v864
  %v1370 = vpack.c.b16 %v870, %v865
  %v1371 = vpack.c.b16 %v871, %v866
  %v1372 = vpack.c.b16 %v872, %v867
  %v1373 = vpack.c.b16 %v873, %v868
  %v1374 = vpack.c.b16 %v879, %v874
  %v1375 = vpack.c.b16 %v880, %v875
  %v1376 = vpack.c.b16 %v881, %v876
  %v1377 = vpack.c.b16 %v882, %v877
  %v1378 = vpack.c.b16 %v883, %v878
  %v1379 = vpack.c.b16 %v889, %v884
  %v1380 = vpack.c.b16 %v890, %v885
  %v1381 = vpack.c.b16 %v891, %v886
  %v1382 = vpack.c.b16 %v892, %v887
  %v1383 = vpack.c.b16 %v893, %v888
  %v1384 = vpack.c.b16 %v899, %v894
  %v1385 = vpack.c.b16 %v900, %v895
  %v1386 = vpack.c.b16 %v901, %v896
  %v1387 = vpack.c.b16 %v902, %v897
  %v1388 = vpack.c.b16 %v903, %v898
  %v1389 = vpack.c.b16 %v909, %v904
  %v1390 = vpack.c.b16 %v910, %v905
  %v1391 = vpack.c.b16 %v911, %v906
  %v1392 = vpack.c.b16 %v912, %v907
  %v1393 = vpack.c.b16 %v913, %v908
  %v1394 = vpack.c.b16 %v919, %v914
  %v1395 = vpack.c.b16 %v920, %v915
  %v1396 = vpack.c.b16 %v921, %v916
  %v1397 = vpack.c.b16 %v922, %v917
  %v1398 = vpack.c.b16 %v923, %v918
  %v1399 = vpack.c.b16 %v929, %v924
  %v1400 = vpack.c.b16 %v930, %v925
  %v1401 = vpack.c.b16 %v931, %v926
  %v1402 = vpack.c.b16 %v932, %v927
  %v1403 = vpack.c.b16 %v933, %v928
  %v1404 = vpack.c.b16 %v939, %v934
  %v1405 = vpack.c.b16 %v940, %v935
  %v1406 = vpack.c.b16 %v941, %v936
  %v1407 = vpack.c.b16 %v942, %v937
  %v1408 = vpack.c.b16 %v943, %v938
  %v1409 = vpack.c.b16 %v949, %v944
  %v1410 = vpack.c.b16 %v950, %v945
  %v1411 = vpack.c.b16 %v951, %v946
  %v1412 = vpack.c.b16 %v952, %v947
  %v1413 = vpack.c.b16 %v953, %v948
  %v1414 = vpack.c.b16 %v959, %v954
  %v1415 = vpack.c.b16 %v960, %v955
  %v1416 = vpack.c.b16 %v961, %v956
  %v1417 = vpack.c.b16 %v962, %v957
  %v1418 = vpack.c.b16 %v963, %v958
  %v1419 = vpack.c.b16 %v969, %v964
  %v1420 = vpack.c.b16 %v970, %v965
  %v1421 = vpack.c.b16 %v971, %v966
  %v1422 = vpack.c.b16 %v972, %v967
  %v1423 = vpack.c.b16 %v973, %v968
  %v1424 = vpack.c.b16 %v979, %v974
  %v1425 = vpack.c.b16 %v980, %v975
  %v1426 = vpack.c.b16 %v981, %v976
  %v1427 = vpack.c.b16 %v982, %v977
  %v1428 = vpack.c.b16 %v983, %v978
  %v1429 = vpack.c.b16 %v989, %v984
  %v1430 = vpack.c.b16 %v990, %v985
  %v1431 = vpack.c.b16 %v991, %v986
  %v1432 = vpack.c.b16 %v992, %v987
  %v1433 = vpack.c.b16 %v993, %v988
  %v1434 = vpack.c.b16 %v999, %v994
  %v1435 = vpack.c.b16 %v1000, %v995
  %v1436 = vpack.c.b16 %v1001, %v996
  %v1437 = vpack.c.b16 %v1002, %v997
  %v1438 = vpack.c.b16 %v1003, %v998
  %v1439 = vpack.c.b16 %v1009, %v1004
  %v1440 = vpack.c.b16 %v1010, %v1005
  %v1441 = vpack.c.b16 %v1011, %v1006
  %v1442 = vpack.c.b16 %v1012, %v1007
  %v1443 = vpack.c.b16 %v1013, %v1008
  %v1444 = vpack.c.b16 %v1019, %v1014
  %v1445 = vpack.c.b16 %v1020, %v1015
  %v1446 = vpack.c.b16 %v1021, %v1016
  %v1447 = vpack.c.b16 %v1022, %v1017
  %v1448 = vpack.c.b16 %v1023, %v1018
  %v1449 = vpack.c.b16 %v1029, %v1024
  %v1450 = vpack.c.b16 %v1030, %v1025
  %v1451 = vpack.c.b16 %v1031, %v1026
  %v1452 = vpack.c.b16 %v1032, %v1027
  %v1453 = vpack.c.b16 %v1033, %v1028
  %v1454 = vpack.c.b16 %v1039, %v1034
  %v1455 = vpack.c.b16 %v1040, %v1035
  %v1456 = vpack.c.b16 %v1041, %v1036
  %v1457 = vpack.c.b16 %v1042, %v1037
  %v1458 = vpack.c.b16 %v1043, %v1038
  %v1459 = vpack.c.b16 %v1049, %v1044
  %v1460 = vpack.c.b16 %v1050, %v1045
  %v1461 = vpack.c.b16 %v1051, %v1046
  %v1462 = vpack.c.b16 %v1052, %v1047
  %v1463 = vpack.c.b16 %v1053, %v1048
  %v1464 = vpack.c.b16 %v1059, %v1054
  %v1465 = vpack.c.b16 %v1060, %v1055
  %v1466 = vpack.c.b16 %v1061, %v1056
  %v1467 = vpack.c.b16 %v1062, %v1057
  %v1468 = vpack.c.b16 %v1063, %v1058
  %v1469 = vpack.c.b16 %v1069, %v1064
  %v1470 = vpack.c.b16 %v1070, %v1065
  %v1471 = vpack.c.b16 %v1071, %v1066
  %v1472 = vpack.c.b16 %v1072, %v1067
  %v1473 = vpack.c.b16 %v1073, %v1068
  %v1474 = vpack.c.b16 %v1079, %v1074
  %v1475 = vpack.c.b16 %v1080, %v1075
  %v1476 = vpack.c.b16 %v1081, %v1076
  %v1477 = vpack.c.b16 %v1082, %v1077
  %v1478 = vpack.c.b16 %v1083, %v1078
  %v1479 = vpack.c.b16 %v1089, %v1084
  %v1480 = vpack.c.b16 %v1090, %v1085
  %v1481 = vpack.c.b16 %v1091, %v1086
  %v1482 = vpack.c.b16 %v1092, %v1087
  %v1483 = vpack.c.b16 %v1093, %v1088
  %v1484 = vpack.c.b16 %v1099, %v1094
  %v1485 = vpack.c.b16 %v1100, %v1095
  %v1486 = vpack.c.b16 %v1101, %v1096
  %v1487 = vpack.c.b16 %v1102, %v1097
  %v1488 = vpack.c.b16 %v1103, %v1098
  %v1489 = vpack.c.b16 %v1109, %v1104
  %v1490 = vpack.c.b16 %v1110, %v1105
  %v1491 = vpack.c.b16 %v1111, %v1106
  %v1492 = vpack.c.b16 %v1112, %v1107
  %v1493 = vpack.c.b16 %v1113, %v1108
  %v1494 = vpack.c.b16 %v1119, %v1114
  %v1495 = vpack.c.b16 %v1120, %v1115
  %v1496 = vpack.c.b16 %v1121, %v1116
  %v1497 = vpack.c.b16 %v1122, %v1117
  %v1498 = vpack.c.b16 %v1123, %v1118
  %v1499 = vpack.c.b16 %v1129, %v1124
  %v1500 = vpack.c.b16 %v1130, %v1125
  %v1501 = vpack.c.b16 %v1131, %v1126
  %v1502 = vpack.c.b16 %v1132, %v1127
  %v1503 = vpack.c.b16 %v1133, %v1128
  %v1504 = vpack.c.b16 %v1139, %v1134
  %v1505 = vpack.c.b16 %v1140, %v1135
  %v1506 = vpack.c.b16 %v1141, %v1136
  %v1507 = vpack.c.b16 %v1142, %v1137
  %v1508 = vpack.c.b16 %v1143, %v1138
  %v1509 = vpack.c.b16 %v1149, %v1144
  %v1510 = vpack.c.b16 %v1150, %v1145
  %v1511 = vpack.c.b16 %v1151, %v1146
  %v1512 = vpack.c.b16 %v1152, %v1147
  %v1513 = vpack.c.b16 %v1153, %v1148
  %v1514 = vpack.c.b16 %v1159, %v1154
  %v1515 = vpack.c.b16 %v1160, %v1155
  %v1516 = vpack.c.b16 %v1161, %v1156
  %v1517 = vpack.c.b16 %v1162, %v1157
  %v1518 = vpack.c.b16 %v1163, %v1158
  %v1519 = vpack.c.b16 %v1169, %v1164
  %v1520 = vpack.c.b16 %v1170, %v1165
  %v1521 = vpack.c.b16 %v1171, %v1166
  %v1522 = vpack.c.b16 %v1172, %v1167
  %v1523 = vpack.c.b16 %v1173, %v1168
  %v1524 = vpack.c.b16 %v1179, %v1174
  %v1525 = vpack.c.b16 %v1180, %v1175
  %v1526 = vpack.c.b16 %v1181, %v1176
  %v1527 = vpack.c.b16 %v1182, %v1177
  %v1528 = vpack.c.b16 %v1183, %v1178
  %v1529 = vpack.c.b16 %v1189, %v1184
  %v1530 = vpack.c.b16 %v1190, %v1185
  %v1531 = vpack.c.b16 %v1191, %v1186
  %v1532 = vpack.c.b16 %v1192, %v1187
  %v1533 = vpack.c.b16 %v1193, %v1188
  %v1534 = vpack.c.b16 %v1199, %v1194
  %v1535 = vpack.c.b16 %v1200, %v1195
  %v1536 = vpack.c.b16 %v1201, %v1196
  %v1537 = vpack.c.b16 %v1202, %v1197
  %v1538 = vpack.c.b16 %v1203, %v1198
  %v1539 = vpack.c.b16 %v1209, %v1204
  %v1540 = vpack.c.b16 %v1210, %v1205
  %v1541 = vpack.c.b16 %v1211, %v1206
  %v1542 = vpack.c.b16 %v1212, %v1207
  %v1543 = vpack.c.b16 %v1213, %v1208
  %v1544 = vpack.c.b16 %v1219, %v1214
  %v1545 = vpack.c.b16 %v1220, %v1215
  %v1546 = vpack.c.b16 %v1221, %v1216
  %v1547 = vpack.c.b16 %v1222, %v1217
  %v1548 = vpack.c.b16 %v1223, %v1218
  %v1549 = vpack.c.b16 %v1229, %v1224
  %v1550 = vpack.c.b16 %v1230, %v1225
  %v1551 = vpack.c.b16 %v1231, %v1226
  %v1552 = vpack.c.b16 %v1232, %v1227
  %v1553 = vpack.c.b16 %v1233, %v1228
  %v1554 = vpack.c.b16 %v1239, %v1234
  %v1555 = vpack.c.b16 %v1240, %v1235
  %v1556 = vpack.c.b16 %v1241, %v1236
  %v1557 = vpack.c.b16 %v1242, %v1237
  %v1558 = vpack.c.b16 %v1243, %v1238
  %v1559 = vpack.c.b16 %v1249, %v1244
  %v1560 = vpack.c.b16 %v1250, %v1245
  %v1561 = vpack.c.b16 %v1251, %v1246
  %v1562 = vpack.c.b16 %v1252, %v1247
  %v1563 = vpack.c.b16 %v1253, %v1248
  %v1564 = vpack.c.b16 %v1259, %v1254
  %v1565 = vpack.c.b16 %v1260, %v1255
  %v1566 = vpack.c.b16 %v1261, %v1256
  %v1567 = vpack.c.b16 %v1262, %v1257
  %v1568 = vpack.c.b16 %v1263, %v1258
  %v1569 = vpack.c.b16 %v1269, %v1264
  %v1570 = vpack.c.b16 %v1270, %v1265
  %v1571 = vpack.c.b16 %v1271, %v1266
  %v1572 = vpack.c.b16 %v1272, %v1267
  %v1573 = vpack.c.b16 %v1273, %v1268
  %v1574 = vpack.c.b16 %v1279, %v1274
  %v1575 = vpack.c.b16 %v1280, %v1275
  %v1576 = vpack.c.b16 %v1281, %v1276
  %v1577 = vpack.c.b16 %v1282, %v1277
  %v1578 = vpack.c.b16 %v1283, %v1278
  %v1579 = vpack.c.b16 %v1289, %v1284
  %v1580 = vpack.c.b16 %v1290, %v1285
  %v1581 = vpack.c.b16 %v1291, %v1286
  %v1582 = vpack.c.b16 %v1292, %v1287
  %v1583 = vpack.c.b16 %v1293, %v1288
  %v1584 = vpack.c.b16 %v1299, %v1294
  %v1585 = vpack.c.b16 %v1300, %v1295
  %v1586 = vpack.c.b16 %v1301, %v1296
  %v1587 = vpack.c.b16 %v1302, %v1297
  %v1588 = vpack.c.b16 %v1303, %v1298
  %v1589 = vpack.c.b16 %v1309, %v1304
  %v1590 = vpack.c.b16 %v1310, %v1305
  %v1591 = vpack.c.b16 %v1311, %v1306
  %v1592 = vpack.c.b16 %v1312, %v1307
  %v1593 = vpack.c.b16 %v1313, %v1308
  %1874 = vmatprep.subr.bf16.mxu0 %v1315
  %1875 = vmatpush1.bf16.msra.mxu0 %v1314
  %1876 = vmatprep.subr.bf16.mxu0 %v1320
  %1877 = vmatpush1.bf16.msra.mxu0 %v1319
  %1878 = vmatprep.subr.bf16.mxu0 %v1325
  %1879 = vmatpush1.bf16.msra.mxu0 %v1324
  %1880 = vmatprep.subr.bf16.mxu0 %v1330
  %1881 = vmatpush1.bf16.msra.mxu0 %v1329
  %1882 = vmatprep.subr.bf16.mxu0 %v1335
  %1883 = vmatpush1.bf16.msra.mxu0 %v1334
  %1884 = vmatprep.subr.bf16.mxu0 %v1340
  %1885 = vmatpush1.bf16.msra.mxu0 %v1339
  %1886 = vmatprep.subr.bf16.mxu0 %v1345
  %1887 = vmatpush1.bf16.msra.mxu0 %v1344
  %1888 = vmatprep.subr.bf16.mxu0 %v1350
  %1889 = vmatpush1.bf16.msra.mxu0 %v1349
  %1890 = vmatprep.subr.bf16.mxu0 %v1355
  %1891 = vmatpush1.bf16.msra.mxu0 %v1354
  %1892 = vmatprep.subr.bf16.mxu0 %v1360
  %1893 = vmatpush1.bf16.msra.mxu0 %v1359
  %1894 = vmatprep.subr.bf16.mxu0 %v1365
  %1895 = vmatpush1.bf16.msra.mxu0 %v1364
  %1896 = vmatprep.subr.bf16.mxu0 %v1370
  %1897 = vmatpush1.bf16.msra.mxu0 %v1369
  %1898 = vmatprep.subr.bf16.mxu0 %v1375
  %1899 = vmatpush1.bf16.msra.mxu0 %v1374
  %1900 = vmatprep.subr.bf16.mxu0 %v1380
  %1901 = vmatpush1.bf16.msra.mxu0 %v1379
  %1902 = vmatprep.subr.bf16.mxu0 %v1385
  %1903 = vmatpush1.bf16.msra.mxu0 %v1384
  %1904 = vmatprep.subr.bf16.mxu0 %v1390
  %1905 = vmatpush1.bf16.msra.mxu0 %v1389
  %1906 = vmatprep.mubr.bf16.mxu0 %v49
  %1907 = vmatmul.mubr.bf16.gmra.mrb[0].mxu0 %v48
  %v1908 = vpop.f32.mrb[0].mxu0
  %v1909 = vadd.f32 %v396, %v1908
  %v1910 = vpop.f32.mrb[0].mxu0
  %v1911 = vadd.f32 %v400, %v1910
  %v1912 = vpop.f32.mrb[0].mxu0
  %v1913 = vpop.f32.mrb[0].mxu0
  %1914 = vdwg.mxu0
  %1915 = vmatprep.subr.bf16.mxu0 %v1395
  %1916 = vmatpush1.bf16.msra.mxu0 %v1394
  %1917 = vmatprep.subr.bf16.mxu0 %v1400
  %1918 = vmatpush1.bf16.msra.mxu0 %v1399
  %1919 = vmatprep.subr.bf16.mxu0 %v1405
  %1920 = vmatpush1.bf16.msra.mxu0 %v1404
  %1921 = vmatprep.subr.bf16.mxu0 %v1410
  %1922 = vmatpush1.bf16.msra.mxu0 %v1409
  %1923 = vmatprep.subr.bf16.mxu0 %v1415
  %1924 = vmatpush1.bf16.msra.mxu0 %v1414
  %1925 = vmatprep.subr.bf16.mxu0 %v1420
  %1926 = vmatpush1.bf16.msra.mxu0 %v1419
  %1927 = vmatprep.subr.bf16.mxu0 %v1425
  %1928 = vmatpush1.bf16.msra.mxu0 %v1424
  %1929 = vmatprep.subr.bf16.mxu0 %v1430
  %1930 = vmatpush1.bf16.msra.mxu0 %v1429
  %1931 = vmatprep.subr.bf16.mxu0 %v1435
  %1932 = vmatpush1.bf16.msra.mxu0 %v1434
  %1933 = vmatprep.subr.bf16.mxu0 %v1440
  %1934 = vmatpush1.bf16.msra.mxu0 %v1439
  %1935 = vmatprep.subr.bf16.mxu0 %v1445
  %1936 = vmatpush1.bf16.msra.mxu0 %v1444
  %1937 = vmatprep.subr.bf16.mxu0 %v1450
  %1938 = vmatpush1.bf16.msra.mxu0 %v1449
  %1939 = vmatprep.subr.bf16.mxu0 %v1455
  %1940 = vmatpush1.bf16.msra.mxu0 %v1454
  %1941 = vmatprep.subr.bf16.mxu0 %v1460
  %1942 = vmatpush1.bf16.msra.mxu0 %v1459
  %1943 = vmatprep.subr.bf16.mxu0 %v1465
  %1944 = vmatpush1.bf16.msra.mxu0 %v1464
  %1945 = vmatprep.subr.bf16.mxu0 %v1470
  %1946 = vmatpush1.bf16.msra.mxu0 %v1469
  %1947 = vmatprep.mubr.bf16.mxu0 %v51
  %1948 = vmatmul.mubr.bf16.gmra.mrb[0].mxu0 %v50
  %v1949 = vpop.f32.mrb[0].mxu0
  %v1950 = vadd.f32 %v1909, %v1949
  %v1951 = vpop.f32.mrb[0].mxu0
  %v1952 = vadd.f32 %v1911, %v1951
  %v1953 = vpop.f32.mrb[0].mxu0
  %v1954 = vpop.f32.mrb[0].mxu0
  %1955 = vdwg.mxu0
  %1956 = vmatprep.subr.bf16.mxu0 %v1475
  %1957 = vmatpush1.bf16.msra.mxu0 %v1474
  %1958 = vmatprep.subr.bf16.mxu0 %v1480
  %1959 = vmatpush1.bf16.msra.mxu0 %v1479
  %1960 = vmatprep.subr.bf16.mxu0 %v1485
  %1961 = vmatpush1.bf16.msra.mxu0 %v1484
  %1962 = vmatprep.subr.bf16.mxu0 %v1490
  %1963 = vmatpush1.bf16.msra.mxu0 %v1489
  %1964 = vmatprep.subr.bf16.mxu0 %v1495
  %1965 = vmatpush1.bf16.msra.mxu0 %v1494
  %1966 = vmatprep.subr.bf16.mxu0 %v1500
  %1967 = vmatpush1.bf16.msra.mxu0 %v1499
  %1968 = vmatprep.subr.bf16.mxu0 %v1505
  %1969 = vmatpush1.bf16.msra.mxu0 %v1504
  %1970 = vmatprep.subr.bf16.mxu0 %v1510
  %1971 = vmatpush1.bf16.msra.mxu0 %v1509
  %1972 = vmatprep.subr.bf16.mxu0 %v1515
  %1973 = vmatpush1.bf16.msra.mxu0 %v1514
  %1974 = vmatprep.subr.bf16.mxu0 %v1520
  %1975 = vmatpush1.bf16.msra.mxu0 %v1519
  %1976 = vmatprep.subr.bf16.mxu0 %v1525
  %1977 = vmatpush1.bf16.msra.mxu0 %v1524
  %1978 = vmatprep.subr.bf16.mxu0 %v1530
  %1979 = vmatpush1.bf16.msra.mxu0 %v1529
  %1980 = vmatprep.subr.bf16.mxu0 %v1535
  %1981 = vmatpush1.bf16.msra.mxu0 %v1534
  %1982 = vmatprep.subr.bf16.mxu0 %v1540
  %1983 = vmatpush1.bf16.msra.mxu0 %v1539
  %1984 = vmatprep.subr.bf16.mxu0 %v1545
  %1985 = vmatpush1.bf16.msra.mxu0 %v1544
  %1986 = vmatprep.subr.bf16.mxu0 %v1550
  %1987 = vmatpush1.bf16.msra.mxu0 %v1549
  %1988 = vmatprep.mubr.bf16.mxu0 %v53
  %1989 = vmatmul.mubr.bf16.gmra.mrb[0].mxu0 %v52
  %v1990 = vpop.f32.mrb[0].mxu0
  %v1991 = vadd.f32 %v1950, %v1990
  %v1992 = vpop.f32.mrb[0].mxu0
  %v1993 = vadd.f32 %v1952, %v1992
  %v1994 = vpop.f32.mrb[0].mxu0
  %v1995 = vpop.f32.mrb[0].mxu0
  %1996 = vdwg.mxu0
  %1997 = vmatprep.subr.bf16.mxu0 %v1555
  %1998 = vmatpush1.bf16.msra.mxu0 %v1554
  %1999 = vmatprep.subr.bf16.mxu0 %v1560
  %2000 = vmatpush1.bf16.msra.mxu0 %v1559
  %2001 = vmatprep.subr.bf16.mxu0 %v1565
  %2002 = vmatpush1.bf16.msra.mxu0 %v1564
  %2003 = vmatprep.subr.bf16.mxu0 %v1570
  %2004 = vmatpush1.bf16.msra.mxu0 %v1569
  %2005 = vmatprep.subr.bf16.mxu0 %v1575
  %2006 = vmatpush1.bf16.msra.mxu0 %v1574
  %2007 = vmatprep.subr.bf16.mxu0 %v1580
  %2008 = vmatpush1.bf16.msra.mxu0 %v1579
  %2009 = vmatprep.subr.bf16.mxu0 %v1585
  %2010 = vmatpush1.bf16.msra.mxu0 %v1584
  %2011 = vmatprep.subr.bf16.mxu0 %v1590
  %2012 = vmatpush1.bf16.msra.mxu0 %v1589
  %2013 = vmatprep.subr.bf16.mxu0 0
  %2014 = vmatpush1.bf16.msra.mxu0 0
  %2015 = vmatprep.subr.bf16.mxu0 0
  %2016 = vmatpush1.bf16.msra.mxu0 0
  %2017 = vmatprep.subr.bf16.mxu0 0
  %2018 = vmatpush1.bf16.msra.mxu0 0
  %2019 = vmatprep.subr.bf16.mxu0 0
  %2020 = vmatpush1.bf16.msra.mxu0 0
  %2021 = vmatprep.subr.bf16.mxu0 0
  %2022 = vmatpush1.bf16.msra.mxu0 0
  %2023 = vmatprep.subr.bf16.mxu0 0
  %2024 = vmatpush1.bf16.msra.mxu0 0
  %2025 = vmatprep.subr.bf16.mxu0 0
  %2026 = vmatpush1.bf16.msra.mxu0 0
  %2027 = vmatprep.subr.bf16.mxu0 0
  %2028 = vmatpush1.bf16.msra.mxu0 0
  %2029 = vmatprep.mubr.bf16.mxu0 0
  %2030 = vmatmul.mubr.bf16.gmra.mrb[0].mxu0 %v54
  %v2031 = vpop.f32.mrb[0].mxu0
  %v2032 = vadd.f32 %v1991, %v2031
  %v2033 = vpop.f32.mrb[0].mxu0
  %v2034 = vadd.f32 %v1993, %v2033
  %v2035 = vpop.f32.mrb[0].mxu0
  %v2036 = vpop.f32.mrb[0].mxu0
  %2037 = vdwg.mxu0
  %2038 = vmatprep.subr.bf16.mxu0 %v1317
  %2039 = vmatpush1.bf16.msra.mxu0 %v1316
  %2040 = vmatprep.subr.bf16.mxu0 %v1322
  %2041 = vmatpush1.bf16.msra.mxu0 %v1321
  %2042 = vmatprep.subr.bf16.mxu0 %v1327
  %2043 = vmatpush1.bf16.msra.mxu0 %v1326
  %2044 = vmatprep.subr.bf16.mxu0 %v1332
  %2045 = vmatpush1.bf16.msra.mxu0 %v1331
  %2046 = vmatprep.subr.bf16.mxu0 %v1337
  %2047 = vmatpush1.bf16.msra.mxu0 %v1336
  %2048 = vmatprep.subr.bf16.mxu0 %v1342
  %2049 = vmatpush1.bf16.msra.mxu0 %v1341
  %2050 = vmatprep.subr.bf16.mxu0 %v1347
  %2051 = vmatpush1.bf16.msra.mxu0 %v1346
  %2052 = vmatprep.subr.bf16.mxu0 %v1352
  %2053 = vmatpush1.bf16.msra.mxu0 %v1351
  %2054 = vmatprep.subr.bf16.mxu0 %v1357
  %2055 = vmatpush1.bf16.msra.mxu0 %v1356
  %2056 = vmatprep.subr.bf16.mxu0 %v1362
  %2057 = vmatpush1.bf16.msra.mxu0 %v1361
  %2058 = vmatprep.subr.bf16.mxu0 %v1367
  %2059 = vmatpush1.bf16.msra.mxu0 %v1366
  %2060 = vmatprep.subr.bf16.mxu0 %v1372
  %2061 = vmatpush1.bf16.msra.mxu0 %v1371
  %2062 = vmatprep.subr.bf16.mxu0 %v1377
  %2063 = vmatpush1.bf16.msra.mxu0 %v1376
  %2064 = vmatprep.subr.bf16.mxu0 %v1382
  %2065 = vmatpush1.bf16.msra.mxu0 %v1381
  %2066 = vmatprep.subr.bf16.mxu0 %v1387
  %2067 = vmatpush1.bf16.msra.mxu0 %v1386
  %2068 = vmatprep.subr.bf16.mxu0 %v1392
  %2069 = vmatpush1.bf16.msra.mxu0 %v1391
  %2070 = vmatprep.mubr.bf16.mxu0 %v49
  %2071 = vmatmul.mubr.bf16.gmra.mrb[0].mxu0 %v48
  %v2072 = vpop.f32.mrb[0].mxu0
  %v2073 = vadd.f32 %v404, %v2072
  %v2074 = vpop.f32.mrb[0].mxu0
  %v2075 = vadd.f32 %v408, %v2074
  %v2076 = vpop.f32.mrb[0].mxu0
  %v2077 = vpop.f32.mrb[0].mxu0
  %2078 = vdwg.mxu0
  %2079 = vmatprep.subr.bf16.mxu0 %v1397
  %2080 = vmatpush1.bf16.msra.mxu0 %v1396
  %2081 = vmatprep.subr.bf16.mxu0 %v1402
  %2082 = vmatpush1.bf16.msra.mxu0 %v1401
  %2083 = vmatprep.subr.bf16.mxu0 %v1407
  %2084 = vmatpush1.bf16.msra.mxu0 %v1406
  %2085 = vmatprep.subr.bf16.mxu0 %v1412
  %2086 = vmatpush1.bf16.msra.mxu0 %v1411
  %2087 = vmatprep.subr.bf16.mxu0 %v1417
  %2088 = vmatpush1.bf16.msra.mxu0 %v1416
  %2089 = vmatprep.subr.bf16.mxu0 %v1422
  %2090 = vmatpush1.bf16.msra.mxu0 %v1421
  %2091 = vmatprep.subr.bf16.mxu0 %v1427
  %2092 = vmatpush1.bf16.msra.mxu0 %v1426
  %2093 = vmatprep.subr.bf16.mxu0 %v1432
  %2094 = vmatpush1.bf16.msra.mxu0 %v1431
  %2095 = vmatprep.subr.bf16.mxu0 %v1437
  %2096 = vmatpush1.bf16.msra.mxu0 %v1436
  %2097 = vmatprep.subr.bf16.mxu0 %v1442
  %2098 = vmatpush1.bf16.msra.mxu0 %v1441
  %2099 = vmatprep.subr.bf16.mxu0 %v1447
  %2100 = vmatpush1.bf16.msra.mxu0 %v1446
  %2101 = vmatprep.subr.bf16.mxu0 %v1452
  %2102 = vmatpush1.bf16.msra.mxu0 %v1451
  %2103 = vmatprep.subr.bf16.mxu0 %v1457
  %2104 = vmatpush1.bf16.msra.mxu0 %v1456
  %2105 = vmatprep.subr.bf16.mxu0 %v1462
  %2106 = vmatpush1.bf16.msra.mxu0 %v1461
  %2107 = vmatprep.subr.bf16.mxu0 %v1467
  %2108 = vmatpush1.bf16.msra.mxu0 %v1466
  %2109 = vmatprep.subr.bf16.mxu0 %v1472
  %2110 = vmatpush1.bf16.msra.mxu0 %v1471
  %2111 = vmatprep.mubr.bf16.mxu0 %v51
  %2112 = vmatmul.mubr.bf16.gmra.mrb[0].mxu0 %v50
  %v2113 = vpop.f32.mrb[0].mxu0
  %v2114 = vadd.f32 %v2073, %v2113
  %v2115 = vpop.f32.mrb[0].mxu0
  %v2116 = vadd.f32 %v2075, %v2115
  %v2117 = vpop.f32.mrb[0].mxu0
  %v2118 = vpop.f32.mrb[0].mxu0
  %2119 = vdwg.mxu0
  %2120 = vmatprep.subr.bf16.mxu0 %v1477
  %2121 = vmatpush1.bf16.msra.mxu0 %v1476
  %2122 = vmatprep.subr.bf16.mxu0 %v1482
  %2123 = vmatpush1.bf16.msra.mxu0 %v1481
  %2124 = vmatprep.subr.bf16.mxu0 %v1487
  %2125 = vmatpush1.bf16.msra.mxu0 %v1486
  %2126 = vmatprep.subr.bf16.mxu0 %v1492
  %2127 = vmatpush1.bf16.msra.mxu0 %v1491
  %2128 = vmatprep.subr.bf16.mxu0 %v1497
  %2129 = vmatpush1.bf16.msra.mxu0 %v1496
  %2130 = vmatprep.subr.bf16.mxu0 %v1502
  %2131 = vmatpush1.bf16.msra.mxu0 %v1501
  %2132 = vmatprep.subr.bf16.mxu0 %v1507
  %2133 = vmatpush1.bf16.msra.mxu0 %v1506
  %2134 = vmatprep.subr.bf16.mxu0 %v1512
  %2135 = vmatpush1.bf16.msra.mxu0 %v1511
  %2136 = vmatprep.subr.bf16.mxu0 %v1517
  %2137 = vmatpush1.bf16.msra.mxu0 %v1516
  %2138 = vmatprep.subr.bf16.mxu0 %v1522
  %2139 = vmatpush1.bf16.msra.mxu0 %v1521
  %2140 = vmatprep.subr.bf16.mxu0 %v1527
  %2141 = vmatpush1.bf16.msra.mxu0 %v1526
  %2142 = vmatprep.subr.bf16.mxu0 %v1532
  %2143 = vmatpush1.bf16.msra.mxu0 %v1531
  %2144 = vmatprep.subr.bf16.mxu0 %v1537
  %2145 = vmatpush1.bf16.msra.mxu0 %v1536
  %2146 = vmatprep.subr.bf16.mxu0 %v1542
  %2147 = vmatpush1.bf16.msra.mxu0 %v1541
  %2148 = vmatprep.subr.bf16.mxu0 %v1547
  %2149 = vmatpush1.bf16.msra.mxu0 %v1546
  %2150 = vmatprep.subr.bf16.mxu0 %v1552
  %2151 = vmatpush1.bf16.msra.mxu0 %v1551
  %2152 = vmatprep.mubr.bf16.mxu0 %v53
  %2153 = vmatmul.mubr.bf16.gmra.mrb[0].mxu0 %v52
  %v2154 = vpop.f32.mrb[0].mxu0
  %v2155 = vadd.f32 %v2114, %v2154
  %v2156 = vpop.f32.mrb[0].mxu0
  %v2157 = vadd.f32 %v2116, %v2156
  %v2158 = vpop.f32.mrb[0].mxu0
  %v2159 = vpop.f32.mrb[0].mxu0
  %2160 = vdwg.mxu0
  %2161 = vmatprep.subr.bf16.mxu0 %v1557
  %2162 = vmatpush1.bf16.msra.mxu0 %v1556
  %2163 = vmatprep.subr.bf16.mxu0 %v1562
  %2164 = vmatpush1.bf16.msra.mxu0 %v1561
  %2165 = vmatprep.subr.bf16.mxu0 %v1567
  %2166 = vmatpush1.bf16.msra.mxu0 %v1566
  %2167 = vmatprep.subr.bf16.mxu0 %v1572
  %2168 = vmatpush1.bf16.msra.mxu0 %v1571
  %2169 = vmatprep.subr.bf16.mxu0 %v1577
  %2170 = vmatpush1.bf16.msra.mxu0 %v1576
  %2171 = vmatprep.subr.bf16.mxu0 %v1582
  %2172 = vmatpush1.bf16.msra.mxu0 %v1581
  %2173 = vmatprep.subr.bf16.mxu0 %v1587
  %2174 = vmatpush1.bf16.msra.mxu0 %v1586
  %2175 = vmatprep.subr.bf16.mxu0 %v1592
  %2176 = vmatpush1.bf16.msra.mxu0 %v1591
  %2177 = vmatprep.subr.bf16.mxu0 0
  %2178 = vmatpush1.bf16.msra.mxu0 0
  %2179 = vmatprep.subr.bf16.mxu0 0
  %2180 = vmatpush1.bf16.msra.mxu0 0
  %2181 = vmatprep.subr.bf16.mxu0 0
  %2182 = vmatpush1.bf16.msra.mxu0 0
  %2183 = vmatprep.subr.bf16.mxu0 0
  %2184 = vmatpush1.bf16.msra.mxu0 0
  %2185 = vmatprep.subr.bf16.mxu0 0
  %2186 = vmatpush1.bf16.msra.mxu0 0
  %2187 = vmatprep.subr.bf16.mxu0 0
  %2188 = vmatpush1.bf16.msra.mxu0 0
  %2189 = vmatprep.subr.bf16.mxu0 0
  %2190 = vmatpush1.bf16.msra.mxu0 0
  %2191 = vmatprep.subr.bf16.mxu0 0
  %2192 = vmatpush1.bf16.msra.mxu0 0
  %2193 = vmatprep.mubr.bf16.mxu0 0
  %2194 = vmatmul.mubr.bf16.gmra.mrb[0].mxu0 %v54
  %v2195 = vpop.f32.mrb[0].mxu0
  %v2196 = vadd.f32 %v2155, %v2195
  %v2197 = vpop.f32.mrb[0].mxu0
  %v2198 = vadd.f32 %v2157, %v2197
  %v2199 = vpop.f32.mrb[0].mxu0
  %v2200 = vpop.f32.mrb[0].mxu0
  %2201 = vdwg.mxu0
  %2202 = vmatprep.subr.bf16.mxu0 0
  %2203 = vmatpush1.bf16.msra.mxu0 %v1318
  %2204 = vmatprep.subr.bf16.mxu0 0
  %2205 = vmatpush1.bf16.msra.mxu0 %v1323
  %2206 = vmatprep.subr.bf16.mxu0 0
  %2207 = vmatpush1.bf16.msra.mxu0 %v1328
  %2208 = vmatprep.subr.bf16.mxu0 0
  %2209 = vmatpush1.bf16.msra.mxu0 %v1333
  %2210 = vmatprep.subr.bf16.mxu0 0
  %2211 = vmatpush1.bf16.msra.mxu0 %v1338
  %2212 = vmatprep.subr.bf16.mxu0 0
  %2213 = vmatpush1.bf16.msra.mxu0 %v1343
  %2214 = vmatprep.subr.bf16.mxu0 0
  %2215 = vmatpush1.bf16.msra.mxu0 %v1348
  %2216 = vmatprep.subr.bf16.mxu0 0
  %2217 = vmatpush1.bf16.msra.mxu0 %v1353
  %2218 = vmatprep.subr.bf16.mxu0 0
  %2219 = vmatpush1.bf16.msra.mxu0 %v1358
  %2220 = vmatprep.subr.bf16.mxu0 0
  %2221 = vmatpush1.bf16.msra.mxu0 %v1363
  %2222 = vmatprep.subr.bf16.mxu0 0
  %2223 = vmatpush1.bf16.msra.mxu0 %v1368
  %2224 = vmatprep.subr.bf16.mxu0 0
  %2225 = vmatpush1.bf16.msra.mxu0 %v1373
  %2226 = vmatprep.subr.bf16.mxu0 0
  %2227 = vmatpush1.bf16.msra.mxu0 %v1378
  %2228 = vmatprep.subr.bf16.mxu0 0
  %2229 = vmatpush1.bf16.msra.mxu0 %v1383
  %2230 = vmatprep.subr.bf16.mxu0 0
  %2231 = vmatpush1.bf16.msra.mxu0 %v1388
  %2232 = vmatprep.subr.bf16.mxu0 0
  %2233 = vmatpush1.bf16.msra.mxu0 %v1393
  %2234 = vmatprep.mubr.bf16.mxu0 %v49
  %2235 = vmatmul.mubr.bf16.gmra.mrb[0].mxu0 %v48
  %v2236 = vpop.f32.mrb[0].mxu0
  %v2237 = vadd.f32 %v412, %v2236
  %v2238 = vpop.f32.mrb[0].mxu0
  %v2239 = vpop.f32.mrb[0].mxu0
  %v2240 = vpop.f32.mrb[0].mxu0
  %2241 = vdwg.mxu0
  %2242 = vmatprep.subr.bf16.mxu0 0
  %2243 = vmatpush1.bf16.msra.mxu0 %v1398
  %2244 = vmatprep.subr.bf16.mxu0 0
  %2245 = vmatpush1.bf16.msra.mxu0 %v1403
  %2246 = vmatprep.subr.bf16.mxu0 0
  %2247 = vmatpush1.bf16.msra.mxu0 %v1408
  %2248 = vmatprep.subr.bf16.mxu0 0
  %2249 = vmatpush1.bf16.msra.mxu0 %v1413
  %2250 = vmatprep.subr.bf16.mxu0 0
  %2251 = vmatpush1.bf16.msra.mxu0 %v1418
  %2252 = vmatprep.subr.bf16.mxu0 0
  %2253 = vmatpush1.bf16.msra.mxu0 %v1423
  %2254 = vmatprep.subr.bf16.mxu0 0
  %2255 = vmatpush1.bf16.msra.mxu0 %v1428
  %2256 = vmatprep.subr.bf16.mxu0 0
  %2257 = vmatpush1.bf16.msra.mxu0 %v1433
  %2258 = vmatprep.subr.bf16.mxu0 0
  %2259 = vmatpush1.bf16.msra.mxu0 %v1438
  %2260 = vmatprep.subr.bf16.mxu0 0
  %2261 = vmatpush1.bf16.msra.mxu0 %v1443
  %2262 = vmatprep.subr.bf16.mxu0 0
  %2263 = vmatpush1.bf16.msra.mxu0 %v1448
  %2264 = vmatprep.subr.bf16.mxu0 0
  %2265 = vmatpush1.bf16.msra.mxu0 %v1453
  %2266 = vmatprep.subr.bf16.mxu0 0
  %2267 = vmatpush1.bf16.msra.mxu0 %v1458
  %2268 = vmatprep.subr.bf16.mxu0 0
  %2269 = vmatpush1.bf16.msra.mxu0 %v1463
  %2270 = vmatprep.subr.bf16.mxu0 0
  %2271 = vmatpush1.bf16.msra.mxu0 %v1468
  %2272 = vmatprep.subr.bf16.mxu0 0
  %2273 = vmatpush1.bf16.msra.mxu0 %v1473
  %2274 = vmatprep.mubr.bf16.mxu0 %v51
  %2275 = vmatmul.mubr.bf16.gmra.mrb[0].mxu0 %v50
  %v2276 = vpop.f32.mrb[0].mxu0
  %v2277 = vadd.f32 %v2237, %v2276
  %v2278 = vpop.f32.mrb[0].mxu0
  %v2279 = vpop.f32.mrb[0].mxu0
  %v2280 = vpop.f32.mrb[0].mxu0
  %2281 = vdwg.mxu0
  %2282 = vmatprep.subr.bf16.mxu0 0
  %2283 = vmatpush1.bf16.msra.mxu0 %v1478
  %2284 = vmatprep.subr.bf16.mxu0 0
  %2285 = vmatpush1.bf16.msra.mxu0 %v1483
  %2286 = vmatprep.subr.bf16.mxu0 0
  %2287 = vmatpush1.bf16.msra.mxu0 %v1488
  %2288 = vmatprep.subr.bf16.mxu0 0
  %2289 = vmatpush1.bf16.msra.mxu0 %v1493
  %2290 = vmatprep.subr.bf16.mxu0 0
  %2291 = vmatpush1.bf16.msra.mxu0 %v1498
  %2292 = vmatprep.subr.bf16.mxu0 0
  %2293 = vmatpush1.bf16.msra.mxu0 %v1503
  %2294 = vmatprep.subr.bf16.mxu0 0
  %2295 = vmatpush1.bf16.msra.mxu0 %v1508
  %2296 = vmatprep.subr.bf16.mxu0 0
  %2297 = vmatpush1.bf16.msra.mxu0 %v1513
  %2298 = vmatprep.subr.bf16.mxu0 0
  %2299 = vmatpush1.bf16.msra.mxu0 %v1518
  %2300 = vmatprep.subr.bf16.mxu0 0
  %2301 = vmatpush1.bf16.msra.mxu0 %v1523
  %2302 = vmatprep.subr.bf16.mxu0 0
  %2303 = vmatpush1.bf16.msra.mxu0 %v1528
  %2304 = vmatprep.subr.bf16.mxu0 0
  %2305 = vmatpush1.bf16.msra.mxu0 %v1533
  %2306 = vmatprep.subr.bf16.mxu0 0
  %2307 = vmatpush1.bf16.msra.mxu0 %v1538
  %2308 = vmatprep.subr.bf16.mxu0 0
  %2309 = vmatpush1.bf16.msra.mxu0 %v1543
  %2310 = vmatprep.subr.bf16.mxu0 0
  %2311 = vmatpush1.bf16.msra.mxu0 %v1548
  %2312 = vmatprep.subr.bf16.mxu0 0
  %2313 = vmatpush1.bf16.msra.mxu0 %v1553
  %2314 = vmatprep.mubr.bf16.mxu0 %v53
  %2315 = vmatmul.mubr.bf16.gmra.mrb[0].mxu0 %v52
  %v2316 = vpop.f32.mrb[0].mxu0
  %v2317 = vadd.f32 %v2277, %v2316
  %v2318 = vpop.f32.mrb[0].mxu0
  %v2319 = vpop.f32.mrb[0].mxu0
  %v2320 = vpop.f32.mrb[0].mxu0
  %2321 = vdwg.mxu0
  %2322 = vmatprep.subr.bf16.mxu0 0
  %2323 = vmatpush1.bf16.msra.mxu0 %v1558
  %2324 = vmatprep.subr.bf16.mxu0 0
  %2325 = vmatpush1.bf16.msra.mxu0 %v1563
  %2326 = vmatprep.subr.bf16.mxu0 0
  %2327 = vmatpush1.bf16.msra.mxu0 %v1568
  %2328 = vmatprep.subr.bf16.mxu0 0
  %2329 = vmatpush1.bf16.msra.mxu0 %v1573
  %2330 = vmatprep.subr.bf16.mxu0 0
  %2331 = vmatpush1.bf16.msra.mxu0 %v1578
  %2332 = vmatprep.subr.bf16.mxu0 0
  %2333 = vmatpush1.bf16.msra.mxu0 %v1583
  %2334 = vmatprep.subr.bf16.mxu0 0
  %2335 = vmatpush1.bf16.msra.mxu0 %v1588
  %2336 = vmatprep.subr.bf16.mxu0 0
  %2337 = vmatpush1.bf16.msra.mxu0 %v1593
  %2338 = vmatprep.subr.bf16.mxu0 0
  %2339 = vmatpush1.bf16.msra.mxu0 0
  %2340 = vmatprep.subr.bf16.mxu0 0
  %2341 = vmatpush1.bf16.msra.mxu0 0
  %2342 = vmatprep.subr.bf16.mxu0 0
  %2343 = vmatpush1.bf16.msra.mxu0 0
  %2344 = vmatprep.subr.bf16.mxu0 0
  %2345 = vmatpush1.bf16.msra.mxu0 0
  %2346 = vmatprep.subr.bf16.mxu0 0
  %2347 = vmatpush1.bf16.msra.mxu0 0
  %2348 = vmatprep.subr.bf16.mxu0 0
  %2349 = vmatpush1.bf16.msra.mxu0 0
  %2350 = vmatprep.subr.bf16.mxu0 0
  %2351 = vmatpush1.bf16.msra.mxu0 0
  %2352 = vmatprep.subr.bf16.mxu0 0
  %2353 = vmatpush1.bf16.msra.mxu0 0
  %2354 = vmatprep.mubr.bf16.mxu0 0
  %2355 = vmatmul.mubr.bf16.gmra.mrb[0].mxu0 %v54
  %v2356 = vpop.f32.mrb[0].mxu0
  %v2357 = vadd.f32 %v2317, %v2356
  %v2358 = vpop.f32.mrb[0].mxu0
  %v2359 = vpop.f32.mrb[0].mxu0
  %v2360 = vpop.f32.mrb[0].mxu0
  %2361 = vdwg.mxu0
  %v2362 = vmax.f32 %v2032, 0.0
  %v2363 = vmax.f32 %v2034, 0.0
  %v2364 = vmax.f32 %v2196, 0.0
  %v2365 = vmax.f32 %v2198, 0.0
  %v2366 = vmax.f32 %v2357, 0.0
  %v2367 = vpack.c.bf16 %v2362, %v2362
  %v2368 = vpack.c.bf16 %v2363, %v2363
  %v2369 = vpack.c.bf16 %v2364, %v2364
  %v2370 = vpack.c.bf16 %v2365, %v2365
  %v2371 = vpack.c.bf16 %v2366, %v2366
  %v2372 = vld [vmem:[%s3] sm:$0xff]
  %v2373 = vld [vmem:[%s3 + $0x8] sm:$0xff]
  %v2374 = vld [vmem:[%s3 + $0x10] sm:$0xff]
  %v2375 = vld [vmem:[%s3 + $0x18] sm:$0xff]
  %v2376 = vld [vmem:[%s3 + $0x20] sm:$0xff]
  %v2377 = vld [vmem:[%s3 + $0x28] sm:$0xff]
  %v2378 = vld [vmem:[%s3 + $0x30] sm:$0xff]
  %v2379 = vld [vmem:[%s3 + $0x38] sm:$0xff]
  %v2380 = vld [vmem:[%s3 + $0x40] sm:$0xff]
  %v2381 = vld [vmem:[%s3 + $0x48] sm:$0xff]
  %v2382 = vld [vmem:[%s3 + $0x50] sm:$0xff]
  %v2383 = vld [vmem:[%s3 + $0x58] sm:$0xff]
  %v2384 = vld [vmem:[%s3 + $0x60] sm:$0xff]
  %v2385 = vld [vmem:[%s3 + $0x68] sm:$0xff]
  %v2386 = vld [vmem:[%s3 + $0x70] sm:$0xff]
  %v2387 = vld [vmem:[%s3 + $0x78] sm:$0xff]
  %v2388 = vld [vmem:[%s3 + $0x80] sm:$0xff]
  %v2389 = vld [vmem:[%s3 + $0x88] sm:$0xff]
  %v2390 = vld [vmem:[%s3 + $0x90] sm:$0xff]
  %v2391 = vld [vmem:[%s3 + $0x98] sm:$0xff]
  %v2392 = vld [vmem:[%s3 + $0xa0] sm:$0xff]
  %v2393 = vld [vmem:[%s3 + $0xa8] sm:$0xff]
  %v2394 = vld [vmem:[%s3 + $0xb0] sm:$0xff]
  %v2395 = vld [vmem:[%s3 + $0xb8] sm:$0xff]
  %v2396 = vld [vmem:[%s3 + $0xc0] sm:$0xff]
  %v2397 = vld [vmem:[%s3 + $0xc8] sm:$0xff]
  %v2398 = vld [vmem:[%s3 + $0xd0] sm:$0xff]
  %v2399 = vld [vmem:[%s3 + $0xd8] sm:$0xff]
  %v2400 = vld [vmem:[%s3 + $0xe0] sm:$0xff]
  %v2401 = vld [vmem:[%s3 + $0xe8] sm:$0xff]
  %v2402 = vld [vmem:[%s3 + $0xf0] sm:$0xff]
  %v2403 = vld [vmem:[%s3 + $0xf8] sm:$0xff]
  %v2404 = vld [vmem:[%s3 + $0x100] sm:$0xff]
  %v2405 = vld [vmem:[%s3 + $0x108] sm:$0xff]
  %v2406 = vld [vmem:[%s3 + $0x110] sm:$0xff]
  %v2407 = vld [vmem:[%s3 + $0x118] sm:$0xff]
  %v2408 = vld [vmem:[%s3 + $0x120] sm:$0xff]
  %v2409 = vld [vmem:[%s3 + $0x128] sm:$0xff]
  %v2410 = vld [vmem:[%s3 + $0x130] sm:$0xff]
  %v2411 = vld [vmem:[%s3 + $0x138] sm:$0xff]
  %v2412 = vld [vmem:[%s3 + $0x140] sm:$0xff]
  %v2413 = vld [vmem:[%s3 + $0x148] sm:$0xff]
  %v2414 = vld [vmem:[%s3 + $0x150] sm:$0xff]
  %v2415 = vld [vmem:[%s3 + $0x158] sm:$0xff]
  %v2416 = vld [vmem:[%s3 + $0x160] sm:$0xff]
  %v2417 = vld [vmem:[%s3 + $0x168] sm:$0xff]
  %v2418 = vld [vmem:[%s3 + $0x170] sm:$0xff]
  %v2419 = vld [vmem:[%s3 + $0x178] sm:$0xff]
  %v2420 = vld [vmem:[%s3 + $0x180] sm:$0xff]
  %v2421 = vld [vmem:[%s3 + $0x188] sm:$0xff]
  %v2422 = vld [vmem:[%s3 + $0x190] sm:$0xff]
  %v2423 = vld [vmem:[%s3 + $0x198] sm:$0xff]
  %v2424 = vld [vmem:[%s3 + $0x1a0] sm:$0xff]
  %v2425 = vld [vmem:[%s3 + $0x1a8] sm:$0xff]
  %v2426 = vld [vmem:[%s3 + $0x1b0] sm:$0xff]
  %v2427 = vld [vmem:[%s3 + $0x1b8] sm:$0xff]
  %v2428 = vld [vmem:[%s3 + $0x1c0] sm:$0xff]
  %v2429 = vld [vmem:[%s3 + $0x1c8] sm:$0xff]
  %v2430 = vld [vmem:[%s3 + $0x1d0] sm:$0xff]
  %v2431 = vld [vmem:[%s3 + $0x1d8] sm:$0xff]
  %v2432 = vld [vmem:[%s3 + $0x1e0] sm:$0xff]
  %v2433 = vld [vmem:[%s3 + $0x1e8] sm:$0xff]
  %v2434 = vld [vmem:[%s3 + $0x1f0] sm:$0xff]
  %v2435 = vld [vmem:[%s3 + $0x1f8] sm:$0xff]
  %v2436 = vld [vmem:[%s3 + $0x200] sm:$0xff]
  %v2437 = vld [vmem:[%s3 + $0x208] sm:$0xff]
  %v2438 = vld [vmem:[%s3 + $0x210] sm:$0xff]
  %v2439 = vld [vmem:[%s3 + $0x218] sm:$0xff]
  %v2440 = vld [vmem:[%s3 + $0x220] sm:$0xff]
  %v2441 = vld [vmem:[%s3 + $0x228] sm:$0xff]
  %v2442 = vld [vmem:[%s3 + $0x230] sm:$0xff]
  %v2443 = vld [vmem:[%s3 + $0x238] sm:$0xff]
  %v2444 = vld [vmem:[%s3 + $0x240] sm:$0xff]
  %v2445 = vld [vmem:[%s3 + $0x248] sm:$0xff]
  %v2446 = vld [vmem:[%s3 + $0x250] sm:$0xff]
  %v2447 = vld [vmem:[%s3 + $0x258] sm:$0xff]
  %v2448 = vld [vmem:[%s3 + $0x260] sm:$0xff]
  %v2449 = vld [vmem:[%s3 + $0x268] sm:$0xff]
  %v2450 = vld [vmem:[%s3 + $0x270] sm:$0xff]
  %v2451 = vld [vmem:[%s3 + $0x278] sm:$0xff]
  %v2452 = vld [vmem:[%s4] sm:$0x3]
  %v2454 = vlaneseq
  %v2455 = vshrl.u32 %v2454, 7
  %v2456 = vsub.s32 0, %v2455
  %v2457 = vrot.slane %v2452, %v2456
  %v2458 = vlaneseq
  %v2459 = vshrl.u32 %v2458, 7
  %v2460 = vsub.s32 1, %v2459
  %v2461 = vrot.slane %v2452, %v2460
  %v2544 = vunpack.c.l.b16 %v2372
  %v2545 = vunpack.c.h.b16 %v2372
  %v2546 = vunpack.c.l.b16 %v2373
  %v2547 = vunpack.c.h.b16 %v2373
  %v2548 = vunpack.c.l.b16 %v2374
  %v2549 = vunpack.c.h.b16 %v2374
  %v2550 = vunpack.c.l.b16 %v2375
  %v2551 = vunpack.c.h.b16 %v2375
  %v2552 = vunpack.c.l.b16 %v2376
  %v2553 = vunpack.c.h.b16 %v2376
  %v2554 = vunpack.c.l.b16 %v2377
  %v2555 = vunpack.c.h.b16 %v2377
  %v2556 = vunpack.c.l.b16 %v2378
  %v2557 = vunpack.c.h.b16 %v2378
  %v2558 = vunpack.c.l.b16 %v2379
  %v2559 = vunpack.c.h.b16 %v2379
  %v2560 = vunpack.c.l.b16 %v2380
  %v2561 = vunpack.c.h.b16 %v2380
  %v2562 = vunpack.c.l.b16 %v2381
  %v2563 = vunpack.c.h.b16 %v2381
  %v2564 = vunpack.c.l.b16 %v2382
  %v2565 = vunpack.c.h.b16 %v2382
  %v2566 = vunpack.c.l.b16 %v2383
  %v2567 = vunpack.c.h.b16 %v2383
  %v2568 = vunpack.c.l.b16 %v2384
  %v2569 = vunpack.c.h.b16 %v2384
  %v2570 = vunpack.c.l.b16 %v2385
  %v2571 = vunpack.c.h.b16 %v2385
  %v2572 = vunpack.c.l.b16 %v2386
  %v2573 = vunpack.c.h.b16 %v2386
  %v2574 = vunpack.c.l.b16 %v2387
  %v2575 = vunpack.c.h.b16 %v2387
  %v2576 = vunpack.c.l.b16 %v2388
  %v2577 = vunpack.c.h.b16 %v2388
  %v2578 = vunpack.c.l.b16 %v2389
  %v2579 = vunpack.c.h.b16 %v2389
  %v2580 = vunpack.c.l.b16 %v2390
  %v2581 = vunpack.c.h.b16 %v2390
  %v2582 = vunpack.c.l.b16 %v2391
  %v2583 = vunpack.c.h.b16 %v2391
  %v2584 = vunpack.c.l.b16 %v2392
  %v2585 = vunpack.c.h.b16 %v2392
  %v2586 = vunpack.c.l.b16 %v2393
  %v2587 = vunpack.c.h.b16 %v2393
  %v2588 = vunpack.c.l.b16 %v2394
  %v2589 = vunpack.c.h.b16 %v2394
  %v2590 = vunpack.c.l.b16 %v2395
  %v2591 = vunpack.c.h.b16 %v2395
  %v2592 = vunpack.c.l.b16 %v2396
  %v2593 = vunpack.c.h.b16 %v2396
  %v2594 = vunpack.c.l.b16 %v2397
  %v2595 = vunpack.c.h.b16 %v2397
  %v2596 = vunpack.c.l.b16 %v2398
  %v2597 = vunpack.c.h.b16 %v2398
  %v2598 = vunpack.c.l.b16 %v2399
  %v2599 = vunpack.c.h.b16 %v2399
  %v2600 = vunpack.c.l.b16 %v2400
  %v2601 = vunpack.c.h.b16 %v2400
  %v2602 = vunpack.c.l.b16 %v2401
  %v2603 = vunpack.c.h.b16 %v2401
  %v2604 = vunpack.c.l.b16 %v2402
  %v2605 = vunpack.c.h.b16 %v2402
  %v2606 = vunpack.c.l.b16 %v2403
  %v2607 = vunpack.c.h.b16 %v2403
  %v2608 = vunpack.c.l.b16 %v2404
  %v2609 = vunpack.c.h.b16 %v2404
  %v2610 = vunpack.c.l.b16 %v2405
  %v2611 = vunpack.c.h.b16 %v2405
  %v2612 = vunpack.c.l.b16 %v2406
  %v2613 = vunpack.c.h.b16 %v2406
  %v2614 = vunpack.c.l.b16 %v2407
  %v2615 = vunpack.c.h.b16 %v2407
  %v2616 = vunpack.c.l.b16 %v2408
  %v2617 = vunpack.c.h.b16 %v2408
  %v2618 = vunpack.c.l.b16 %v2409
  %v2619 = vunpack.c.h.b16 %v2409
  %v2620 = vunpack.c.l.b16 %v2410
  %v2621 = vunpack.c.h.b16 %v2410
  %v2622 = vunpack.c.l.b16 %v2411
  %v2623 = vunpack.c.h.b16 %v2411
  %v2624 = vunpack.c.l.b16 %v2412
  %v2625 = vunpack.c.h.b16 %v2412
  %v2626 = vunpack.c.l.b16 %v2413
  %v2627 = vunpack.c.h.b16 %v2413
  %v2628 = vunpack.c.l.b16 %v2414
  %v2629 = vunpack.c.h.b16 %v2414
  %v2630 = vunpack.c.l.b16 %v2415
  %v2631 = vunpack.c.h.b16 %v2415
  %v2632 = vunpack.c.l.b16 %v2416
  %v2633 = vunpack.c.h.b16 %v2416
  %v2634 = vunpack.c.l.b16 %v2417
  %v2635 = vunpack.c.h.b16 %v2417
  %v2636 = vunpack.c.l.b16 %v2418
  %v2637 = vunpack.c.h.b16 %v2418
  %v2638 = vunpack.c.l.b16 %v2419
  %v2639 = vunpack.c.h.b16 %v2419
  %v2640 = vunpack.c.l.b16 %v2420
  %v2641 = vunpack.c.h.b16 %v2420
  %v2642 = vunpack.c.l.b16 %v2421
  %v2643 = vunpack.c.h.b16 %v2421
  %v2644 = vunpack.c.l.b16 %v2422
  %v2645 = vunpack.c.h.b16 %v2422
  %v2646 = vunpack.c.l.b16 %v2423
  %v2647 = vunpack.c.h.b16 %v2423
  %v2648 = vunpack.c.l.b16 %v2424
  %v2649 = vunpack.c.h.b16 %v2424
  %v2650 = vunpack.c.l.b16 %v2425
  %v2651 = vunpack.c.h.b16 %v2425
  %v2652 = vunpack.c.l.b16 %v2426
  %v2653 = vunpack.c.h.b16 %v2426
  %v2654 = vunpack.c.l.b16 %v2427
  %v2655 = vunpack.c.h.b16 %v2427
  %v2656 = vunpack.c.l.b16 %v2428
  %v2657 = vunpack.c.h.b16 %v2428
  %v2658 = vunpack.c.l.b16 %v2429
  %v2659 = vunpack.c.h.b16 %v2429
  %v2660 = vunpack.c.l.b16 %v2430
  %v2661 = vunpack.c.h.b16 %v2430
  %v2662 = vunpack.c.l.b16 %v2431
  %v2663 = vunpack.c.h.b16 %v2431
  %v2664 = vunpack.c.l.b16 %v2432
  %v2665 = vunpack.c.h.b16 %v2432
  %v2666 = vunpack.c.l.b16 %v2433
  %v2667 = vunpack.c.h.b16 %v2433
  %v2668 = vunpack.c.l.b16 %v2434
  %v2669 = vunpack.c.h.b16 %v2434
  %v2670 = vunpack.c.l.b16 %v2435
  %v2671 = vunpack.c.h.b16 %v2435
  %v2672 = vunpack.c.l.b16 %v2436
  %v2673 = vunpack.c.h.b16 %v2436
  %v2674 = vunpack.c.l.b16 %v2437
  %v2675 = vunpack.c.h.b16 %v2437
  %v2676 = vunpack.c.l.b16 %v2438
  %v2677 = vunpack.c.h.b16 %v2438
  %v2678 = vunpack.c.l.b16 %v2439
  %v2679 = vunpack.c.h.b16 %v2439
  %v2680 = vunpack.c.l.b16 %v2440
  %v2681 = vunpack.c.h.b16 %v2440
  %v2682 = vunpack.c.l.b16 %v2441
  %v2683 = vunpack.c.h.b16 %v2441
  %v2684 = vunpack.c.l.b16 %v2442
  %v2685 = vunpack.c.h.b16 %v2442
  %v2686 = vunpack.c.l.b16 %v2443
  %v2687 = vunpack.c.h.b16 %v2443
  %v2688 = vunpack.c.l.b16 %v2444
  %v2689 = vunpack.c.h.b16 %v2444
  %v2690 = vunpack.c.l.b16 %v2445
  %v2691 = vunpack.c.h.b16 %v2445
  %v2692 = vunpack.c.l.b16 %v2446
  %v2693 = vunpack.c.h.b16 %v2446
  %v2694 = vunpack.c.l.b16 %v2447
  %v2695 = vunpack.c.h.b16 %v2447
  %v2696 = vunpack.c.l.b16 %v2448
  %v2697 = vunpack.c.h.b16 %v2448
  %v2698 = vunpack.c.l.b16 %v2449
  %v2699 = vunpack.c.h.b16 %v2449
  %v2700 = vunpack.c.l.b16 %v2450
  %v2701 = vunpack.c.h.b16 %v2450
  %v2702 = vunpack.c.l.b16 %v2451
  %v2703 = vunpack.c.h.b16 %v2451
  %v2704 = vpack.c.b16 %v2546, %v2544
  %v2705 = vpack.c.b16 %v2547, %v2545
  %v2706 = vpack.c.b16 %v2550, %v2548
  %v2707 = vpack.c.b16 %v2551, %v2549
  %v2708 = vpack.c.b16 %v2554, %v2552
  %v2709 = vpack.c.b16 %v2555, %v2553
  %v2710 = vpack.c.b16 %v2558, %v2556
  %v2711 = vpack.c.b16 %v2559, %v2557
  %v2712 = vpack.c.b16 %v2562, %v2560
  %v2713 = vpack.c.b16 %v2563, %v2561
  %v2714 = vpack.c.b16 %v2566, %v2564
  %v2715 = vpack.c.b16 %v2567, %v2565
  %v2716 = vpack.c.b16 %v2570, %v2568
  %v2717 = vpack.c.b16 %v2571, %v2569
  %v2718 = vpack.c.b16 %v2574, %v2572
  %v2719 = vpack.c.b16 %v2575, %v2573
  %v2720 = vpack.c.b16 %v2578, %v2576
  %v2721 = vpack.c.b16 %v2579, %v2577
  %v2722 = vpack.c.b16 %v2582, %v2580
  %v2723 = vpack.c.b16 %v2583, %v2581
  %v2724 = vpack.c.b16 %v2586, %v2584
  %v2725 = vpack.c.b16 %v2587, %v2585
  %v2726 = vpack.c.b16 %v2590, %v2588
  %v2727 = vpack.c.b16 %v2591, %v2589
  %v2728 = vpack.c.b16 %v2594, %v2592
  %v2729 = vpack.c.b16 %v2595, %v2593
  %v2730 = vpack.c.b16 %v2598, %v2596
  %v2731 = vpack.c.b16 %v2599, %v2597
  %v2732 = vpack.c.b16 %v2602, %v2600
  %v2733 = vpack.c.b16 %v2603, %v2601
  %v2734 = vpack.c.b16 %v2606, %v2604
  %v2735 = vpack.c.b16 %v2607, %v2605
  %v2736 = vpack.c.b16 %v2610, %v2608
  %v2737 = vpack.c.b16 %v2611, %v2609
  %v2738 = vpack.c.b16 %v2614, %v2612
  %v2739 = vpack.c.b16 %v2615, %v2613
  %v2740 = vpack.c.b16 %v2618, %v2616
  %v2741 = vpack.c.b16 %v2619, %v2617
  %v2742 = vpack.c.b16 %v2622, %v2620
  %v2743 = vpack.c.b16 %v2623, %v2621
  %v2744 = vpack.c.b16 %v2626, %v2624
  %v2745 = vpack.c.b16 %v2627, %v2625
  %v2746 = vpack.c.b16 %v2630, %v2628
  %v2747 = vpack.c.b16 %v2631, %v2629
  %v2748 = vpack.c.b16 %v2634, %v2632
  %v2749 = vpack.c.b16 %v2635, %v2633
  %v2750 = vpack.c.b16 %v2638, %v2636
  %v2751 = vpack.c.b16 %v2639, %v2637
  %v2752 = vpack.c.b16 %v2642, %v2640
  %v2753 = vpack.c.b16 %v2643, %v2641
  %v2754 = vpack.c.b16 %v2646, %v2644
  %v2755 = vpack.c.b16 %v2647, %v2645
  %v2756 = vpack.c.b16 %v2650, %v2648
  %v2757 = vpack.c.b16 %v2651, %v2649
  %v2758 = vpack.c.b16 %v2654, %v2652
  %v2759 = vpack.c.b16 %v2655, %v2653
  %v2760 = vpack.c.b16 %v2658, %v2656
  %v2761 = vpack.c.b16 %v2659, %v2657
  %v2762 = vpack.c.b16 %v2662, %v2660
  %v2763 = vpack.c.b16 %v2663, %v2661
  %v2764 = vpack.c.b16 %v2666, %v2664
  %v2765 = vpack.c.b16 %v2667, %v2665
  %v2766 = vpack.c.b16 %v2670, %v2668
  %v2767 = vpack.c.b16 %v2671, %v2669
  %v2768 = vpack.c.b16 %v2674, %v2672
  %v2769 = vpack.c.b16 %v2675, %v2673
  %v2770 = vpack.c.b16 %v2678, %v2676
  %v2771 = vpack.c.b16 %v2679, %v2677
  %v2772 = vpack.c.b16 %v2682, %v2680
  %v2773 = vpack.c.b16 %v2683, %v2681
  %v2774 = vpack.c.b16 %v2686, %v2684
  %v2775 = vpack.c.b16 %v2687, %v2685
  %v2776 = vpack.c.b16 %v2690, %v2688
  %v2777 = vpack.c.b16 %v2691, %v2689
  %v2778 = vpack.c.b16 %v2694, %v2692
  %v2779 = vpack.c.b16 %v2695, %v2693
  %v2780 = vpack.c.b16 %v2698, %v2696
  %v2781 = vpack.c.b16 %v2699, %v2697
  %v2782 = vpack.c.b16 %v2702, %v2700
  %v2783 = vpack.c.b16 %v2703, %v2701
  %2864 = vmatprep.subr.bf16.mxu0 %v2705
  %2865 = vmatpush1.bf16.msra.mxu0 %v2704
  %2866 = vmatprep.subr.bf16.mxu0 %v2707
  %2867 = vmatpush1.bf16.msra.mxu0 %v2706
  %2868 = vmatprep.subr.bf16.mxu0 %v2709
  %2869 = vmatpush1.bf16.msra.mxu0 %v2708
  %2870 = vmatprep.subr.bf16.mxu0 %v2711
  %2871 = vmatpush1.bf16.msra.mxu0 %v2710
  %2872 = vmatprep.subr.bf16.mxu0 %v2713
  %2873 = vmatpush1.bf16.msra.mxu0 %v2712
  %2874 = vmatprep.subr.bf16.mxu0 %v2715
  %2875 = vmatpush1.bf16.msra.mxu0 %v2714
  %2876 = vmatprep.subr.bf16.mxu0 %v2717
  %2877 = vmatpush1.bf16.msra.mxu0 %v2716
  %2878 = vmatprep.subr.bf16.mxu0 %v2719
  %2879 = vmatpush1.bf16.msra.mxu0 %v2718
  %2880 = vmatprep.subr.bf16.mxu0 %v2721
  %2881 = vmatpush1.bf16.msra.mxu0 %v2720
  %2882 = vmatprep.subr.bf16.mxu0 %v2723
  %2883 = vmatpush1.bf16.msra.mxu0 %v2722
  %2884 = vmatprep.subr.bf16.mxu0 %v2725
  %2885 = vmatpush1.bf16.msra.mxu0 %v2724
  %2886 = vmatprep.subr.bf16.mxu0 %v2727
  %2887 = vmatpush1.bf16.msra.mxu0 %v2726
  %2888 = vmatprep.subr.bf16.mxu0 %v2729
  %2889 = vmatpush1.bf16.msra.mxu0 %v2728
  %2890 = vmatprep.subr.bf16.mxu0 %v2731
  %2891 = vmatpush1.bf16.msra.mxu0 %v2730
  %2892 = vmatprep.subr.bf16.mxu0 %v2733
  %2893 = vmatpush1.bf16.msra.mxu0 %v2732
  %2894 = vmatprep.subr.bf16.mxu0 %v2735
  %2895 = vmatpush1.bf16.msra.mxu0 %v2734
  %2896 = vmatprep.mubr.bf16.mxu0 %v2368
  %2897 = vmatmul.mubr.bf16.gmra.mrb[0].mxu0 %v2367
  %v2898 = vpop.f32.mrb[0].mxu0
  %v2899 = vadd.f32 %v2457, %v2898
  %v2900 = vpop.f32.mrb[0].mxu0
  %v2901 = vadd.f32 %v2461, %v2900
  %v2902 = vpop.f32.mrb[0].mxu0
  %v2903 = vpop.f32.mrb[0].mxu0
  %2904 = vdwg.mxu0
  %2905 = vmatprep.subr.bf16.mxu0 %v2737
  %2906 = vmatpush1.bf16.msra.mxu0 %v2736
  %2907 = vmatprep.subr.bf16.mxu0 %v2739
  %2908 = vmatpush1.bf16.msra.mxu0 %v2738
  %2909 = vmatprep.subr.bf16.mxu0 %v2741
  %2910 = vmatpush1.bf16.msra.mxu0 %v2740
  %2911 = vmatprep.subr.bf16.mxu0 %v2743
  %2912 = vmatpush1.bf16.msra.mxu0 %v2742
  %2913 = vmatprep.subr.bf16.mxu0 %v2745
  %2914 = vmatpush1.bf16.msra.mxu0 %v2744
  %2915 = vmatprep.subr.bf16.mxu0 %v2747
  %2916 = vmatpush1.bf16.msra.mxu0 %v2746
  %2917 = vmatprep.subr.bf16.mxu0 %v2749
  %2918 = vmatpush1.bf16.msra.mxu0 %v2748
  %2919 = vmatprep.subr.bf16.mxu0 %v2751
  %2920 = vmatpush1.bf16.msra.mxu0 %v2750
  %2921 = vmatprep.subr.bf16.mxu0 %v2753
  %2922 = vmatpush1.bf16.msra.mxu0 %v2752
  %2923 = vmatprep.subr.bf16.mxu0 %v2755
  %2924 = vmatpush1.bf16.msra.mxu0 %v2754
  %2925 = vmatprep.subr.bf16.mxu0 %v2757
  %2926 = vmatpush1.bf16.msra.mxu0 %v2756
  %2927 = vmatprep.subr.bf16.mxu0 %v2759
  %2928 = vmatpush1.bf16.msra.mxu0 %v2758
  %2929 = vmatprep.subr.bf16.mxu0 %v2761
  %2930 = vmatpush1.bf16.msra.mxu0 %v2760
  %2931 = vmatprep.subr.bf16.mxu0 %v2763
  %2932 = vmatpush1.bf16.msra.mxu0 %v2762
  %2933 = vmatprep.subr.bf16.mxu0 %v2765
  %2934 = vmatpush1.bf16.msra.mxu0 %v2764
  %2935 = vmatprep.subr.bf16.mxu0 %v2767
  %2936 = vmatpush1.bf16.msra.mxu0 %v2766
  %2937 = vmatprep.mubr.bf16.mxu0 %v2370
  %2938 = vmatmul.mubr.bf16.gmra.mrb[0].mxu0 %v2369
  %v2939 = vpop.f32.mrb[0].mxu0
  %v2940 = vadd.f32 %v2899, %v2939
  %v2941 = vpop.f32.mrb[0].mxu0
  %v2942 = vadd.f32 %v2901, %v2941
  %v2943 = vpop.f32.mrb[0].mxu0
  %v2944 = vpop.f32.mrb[0].mxu0
  %2945 = vdwg.mxu0
  %2946 = vmatprep.subr.bf16.mxu0 %v2769
  %2947 = vmatpush1.bf16.msra.mxu0 %v2768
  %2948 = vmatprep.subr.bf16.mxu0 %v2771
  %2949 = vmatpush1.bf16.msra.mxu0 %v2770
  %2950 = vmatprep.subr.bf16.mxu0 %v2773
  %2951 = vmatpush1.bf16.msra.mxu0 %v2772
  %2952 = vmatprep.subr.bf16.mxu0 %v2775
  %2953 = vmatpush1.bf16.msra.mxu0 %v2774
  %2954 = vmatprep.subr.bf16.mxu0 %v2777
  %2955 = vmatpush1.bf16.msra.mxu0 %v2776
  %2956 = vmatprep.subr.bf16.mxu0 %v2779
  %2957 = vmatpush1.bf16.msra.mxu0 %v2778
  %2958 = vmatprep.subr.bf16.mxu0 %v2781
  %2959 = vmatpush1.bf16.msra.mxu0 %v2780
  %2960 = vmatprep.subr.bf16.mxu0 %v2783
  %2961 = vmatpush1.bf16.msra.mxu0 %v2782
  %2962 = vmatprep.subr.bf16.mxu0 0
  %2963 = vmatpush1.bf16.msra.mxu0 0
  %2964 = vmatprep.subr.bf16.mxu0 0
  %2965 = vmatpush1.bf16.msra.mxu0 0
  %2966 = vmatprep.subr.bf16.mxu0 0
  %2967 = vmatpush1.bf16.msra.mxu0 0
  %2968 = vmatprep.subr.bf16.mxu0 0
  %2969 = vmatpush1.bf16.msra.mxu0 0
  %2970 = vmatprep.subr.bf16.mxu0 0
  %2971 = vmatpush1.bf16.msra.mxu0 0
  %2972 = vmatprep.subr.bf16.mxu0 0
  %2973 = vmatpush1.bf16.msra.mxu0 0
  %2974 = vmatprep.subr.bf16.mxu0 0
  %2975 = vmatpush1.bf16.msra.mxu0 0
  %2976 = vmatprep.subr.bf16.mxu0 0
  %2977 = vmatpush1.bf16.msra.mxu0 0
  %2978 = vmatprep.mubr.bf16.mxu0 0
  %2979 = vmatmul.mubr.bf16.gmra.mrb[0].mxu0 %v2371
  %v2980 = vpop.f32.mrb[0].mxu0
  %v2981 = vadd.f32 %v2940, %v2980
  %v2982 = vpop.f32.mrb[0].mxu0
  %v2983 = vadd.f32 %v2942, %v2982
  %v2984 = vpop.f32.mrb[0].mxu0
  %v2985 = vpop.f32.mrb[0].mxu0
  %2986 = vdwg.mxu0
  %v2987 = vmax.f32 %v2981, 0.0
  %v2988 = vmax.f32 %v2983, 0.0
  %v2989 = vpack.c.bf16 %v2987, %v2987
  %v2990 = vpack.c.bf16 %v2988, %v2988
  %v2991 = vld [vmem:[%s5] sm:$0xf]
  %v2992 = vld [vmem:[%s5 + $0x4] sm:$0xf]
  %v2993 = vld [vmem:[%s5 + $0x8] sm:$0xf]
  %v2994 = vld [vmem:[%s5 + $0xc] sm:$0xf]
  %v2995 = vld [vmem:[%s5 + $0x10] sm:$0xf]
  %v2996 = vld [vmem:[%s5 + $0x14] sm:$0xf]
  %v2997 = vld [vmem:[%s5 + $0x18] sm:$0xf]
  %v2998 = vld [vmem:[%s5 + $0x1c] sm:$0xf]
  %v2999 = vld [vmem:[%s5 + $0x20] sm:$0xf]
  %v3000 = vld [vmem:[%s5 + $0x24] sm:$0xf]
  %v3001 = vld [vmem:[%s5 + $0x28] sm:$0xf]
  %v3002 = vld [vmem:[%s5 + $0x2c] sm:$0xf]
  %v3003 = vld [vmem:[%s5 + $0x30] sm:$0xf]
  %v3004 = vld [vmem:[%s5 + $0x34] sm:$0xf]
  %v3005 = vld [vmem:[%s5 + $0x38] sm:$0xf]
  %v3006 = vld [vmem:[%s5 + $0x3c] sm:$0xf]
  %v3007 = vld [vmem:[%s5 + $0x40] sm:$0xf]
  %v3008 = vld [vmem:[%s5 + $0x44] sm:$0xf]
  %v3009 = vld [vmem:[%s5 + $0x48] sm:$0xf]
  %v3010 = vld [vmem:[%s5 + $0x4c] sm:$0xf]
  %v3011 = vld [vmem:[%s5 + $0x50] sm:$0xf]
  %v3012 = vld [vmem:[%s5 + $0x54] sm:$0xf]
  %v3013 = vld [vmem:[%s5 + $0x58] sm:$0xf]
  %v3014 = vld [vmem:[%s5 + $0x5c] sm:$0xf]
  %v3015 = vld [vmem:[%s5 + $0x60] sm:$0xf]
  %v3016 = vld [vmem:[%s5 + $0x64] sm:$0xf]
  %v3017 = vld [vmem:[%s5 + $0x68] sm:$0xf]
  %v3018 = vld [vmem:[%s5 + $0x6c] sm:$0xf]
  %v3019 = vld [vmem:[%s5 + $0x70] sm:$0xf]
  %v3020 = vld [vmem:[%s5 + $0x74] sm:$0xf]
  %v3021 = vld [vmem:[%s5 + $0x78] sm:$0xf]
  %v3022 = vld [vmem:[%s5 + $0x7c] sm:$0xf]
  %v3023 = vld [vmem:[%s6] sm:$0x1]
  %v3025 = vlaneseq
  %v3026 = vshrl.u32 %v3025, 7
  %v3027 = vsub.s32 0, %v3026
  %v3028 = vrot.slane %v3023, %v3027
  %v3062 = vunpack.c.l.b16 %v2991
  %v3063 = vunpack.c.l.b16 %v2992
  %v3064 = vunpack.c.l.b16 %v2993
  %v3065 = vunpack.c.l.b16 %v2994
  %v3066 = vunpack.c.l.b16 %v2995
  %v3067 = vunpack.c.l.b16 %v2996
  %v3068 = vunpack.c.l.b16 %v2997
  %v3069 = vunpack.c.l.b16 %v2998
  %v3070 = vunpack.c.l.b16 %v2999
  %v3071 = vunpack.c.l.b16 %v3000
  %v3072 = vunpack.c.l.b16 %v3001
  %v3073 = vunpack.c.l.b16 %v3002
  %v3074 = vunpack.c.l.b16 %v3003
  %v3075 = vunpack.c.l.b16 %v3004
  %v3076 = vunpack.c.l.b16 %v3005
  %v3077 = vunpack.c.l.b16 %v3006
  %v3078 = vunpack.c.l.b16 %v3007
  %v3079 = vunpack.c.l.b16 %v3008
  %v3080 = vunpack.c.l.b16 %v3009
  %v3081 = vunpack.c.l.b16 %v3010
  %v3082 = vunpack.c.l.b16 %v3011
  %v3083 = vunpack.c.l.b16 %v3012
  %v3084 = vunpack.c.l.b16 %v3013
  %v3085 = vunpack.c.l.b16 %v3014
  %v3086 = vunpack.c.l.b16 %v3015
  %v3087 = vunpack.c.l.b16 %v3016
  %v3088 = vunpack.c.l.b16 %v3017
  %v3089 = vunpack.c.l.b16 %v3018
  %v3090 = vunpack.c.l.b16 %v3019
  %v3091 = vunpack.c.l.b16 %v3020
  %v3092 = vunpack.c.l.b16 %v3021
  %v3093 = vunpack.c.l.b16 %v3022
  %v3094 = vpack.c.b16 %v3063, %v3062
  %v3095 = vpack.c.b16 %v3065, %v3064
  %v3096 = vpack.c.b16 %v3067, %v3066
  %v3097 = vpack.c.b16 %v3069, %v3068
  %v3098 = vpack.c.b16 %v3071, %v3070
  %v3099 = vpack.c.b16 %v3073, %v3072
  %v3100 = vpack.c.b16 %v3075, %v3074
  %v3101 = vpack.c.b16 %v3077, %v3076
  %v3102 = vpack.c.b16 %v3079, %v3078
  %v3103 = vpack.c.b16 %v3081, %v3080
  %v3104 = vpack.c.b16 %v3083, %v3082
  %v3105 = vpack.c.b16 %v3085, %v3084
  %v3106 = vpack.c.b16 %v3087, %v3086
  %v3107 = vpack.c.b16 %v3089, %v3088
  %v3108 = vpack.c.b16 %v3091, %v3090
  %v3109 = vpack.c.b16 %v3093, %v3092
  %3126 = vmatprep.subr.bf16.mxu0 0
  %3127 = vmatpush1.bf16.msra.mxu0 %v3094
  %3128 = vmatprep.subr.bf16.mxu0 0
  %3129 = vmatpush1.bf16.msra.mxu0 %v3095
  %3130 = vmatprep.subr.bf16.mxu0 0
  %3131 = vmatpush1.bf16.msra.mxu0 %v3096
  %3132 = vmatprep.subr.bf16.mxu0 0
  %3133 = vmatpush1.bf16.msra.mxu0 %v3097
  %3134 = vmatprep.subr.bf16.mxu0 0
  %3135 = vmatpush1.bf16.msra.mxu0 %v3098
  %3136 = vmatprep.subr.bf16.mxu0 0
  %3137 = vmatpush1.bf16.msra.mxu0 %v3099
  %3138 = vmatprep.subr.bf16.mxu0 0
  %3139 = vmatpush1.bf16.msra.mxu0 %v3100
  %3140 = vmatprep.subr.bf16.mxu0 0
  %3141 = vmatpush1.bf16.msra.mxu0 %v3101
  %3142 = vmatprep.subr.bf16.mxu0 0
  %3143 = vmatpush1.bf16.msra.mxu0 %v3102
  %3144 = vmatprep.subr.bf16.mxu0 0
  %3145 = vmatpush1.bf16.msra.mxu0 %v3103
  %3146 = vmatprep.subr.bf16.mxu0 0
  %3147 = vmatpush1.bf16.msra.mxu0 %v3104
  %3148 = vmatprep.subr.bf16.mxu0 0
  %3149 = vmatpush1.bf16.msra.mxu0 %v3105
  %3150 = vmatprep.subr.bf16.mxu0 0
  %3151 = vmatpush1.bf16.msra.mxu0 %v3106
  %3152 = vmatprep.subr.bf16.mxu0 0
  %3153 = vmatpush1.bf16.msra.mxu0 %v3107
  %3154 = vmatprep.subr.bf16.mxu0 0
  %3155 = vmatpush1.bf16.msra.mxu0 %v3108
  %3156 = vmatprep.subr.bf16.mxu0 0
  %3157 = vmatpush1.bf16.msra.mxu0 %v3109
  %3158 = vmatprep.mubr.bf16.mxu0 %v2990
  %3159 = vmatmul.mubr.bf16.gmra.mrb[0].mxu0 %v2989
  %v3160 = vpop.f32.mrb[0].mxu0
  %v3161 = vadd.f32 %v3028, %v3160
  %v3162 = vpop.f32.mrb[0].mxu0
  %v3163 = vpop.f32.mrb[0].mxu0
  %v3164 = vpop.f32.mrb[0].mxu0
  %3165 = vdwg.mxu0
  %v3166 = vmax.f32 %v3161, 0.0
  %v3167 = vpack.c.bf16 %v3166, %v3166
  %v3168 = vld [vmem:[%s7] sm:$0xf]
  %v3169 = vld [vmem:[%s7 + $0x4] sm:$0xf]
  %v3170 = vld [vmem:[%s7 + $0x8] sm:$0xf]
  %v3171 = vld [vmem:[%s7 + $0xc] sm:$0xf]
  %v3172 = vld [vmem:[%s7 + $0x10] sm:$0xf]
  %v3173 = vld [vmem:[%s7 + $0x14] sm:$0xf]
  %v3174 = vld [vmem:[%s7 + $0x18] sm:$0xf]
  %v3175 = vld [vmem:[%s7 + $0x1c] sm:$0xf]
  %v3176 = vld [vmem:[%s7 + $0x20] sm:$0xf]
  %v3177 = vld [vmem:[%s7 + $0x24] sm:$0xf]
  %v3178 = vld [vmem:[%s7 + $0x28] sm:$0xf]
  %v3179 = vld [vmem:[%s7 + $0x2c] sm:$0xf]
  %v3180 = vld [vmem:[%s7 + $0x30] sm:$0xf]
  %v3181 = vld [vmem:[%s7 + $0x34] sm:$0xf]
  %v3182 = vld [vmem:[%s7 + $0x38] sm:$0xf]
  %v3183 = vld [vmem:[%s7 + $0x3c] sm:$0xf]
  %v3184 = vld [vmem:[%s8] sm:$0x1]
  %v3186 = vlaneseq
  %v3187 = vshrl.u32 %v3186, 7
  %v3188 = vsub.s32 0, %v3187
  %v3189 = vrot.slane %v3184, %v3188
  %v3207 = vunpack.c.l.b16 %v3168
  %v3208 = vunpack.c.l.b16 %v3169
  %v3209 = vunpack.c.l.b16 %v3170
  %v3210 = vunpack.c.l.b16 %v3171
  %v3211 = vunpack.c.l.b16 %v3172
  %v3212 = vunpack.c.l.b16 %v3173
  %v3213 = vunpack.c.l.b16 %v3174
  %v3214 = vunpack.c.l.b16 %v3175
  %v3215 = vunpack.c.l.b16 %v3176
  %v3216 = vunpack.c.l.b16 %v3177
  %v3217 = vunpack.c.l.b16 %v3178
  %v3218 = vunpack.c.l.b16 %v3179
  %v3219 = vunpack.c.l.b16 %v3180
  %v3220 = vunpack.c.l.b16 %v3181
  %v3221 = vunpack.c.l.b16 %v3182
  %v3222 = vunpack.c.l.b16 %v3183
  %v3223 = vpack.c.b16 %v3208, %v3207
  %v3224 = vpack.c.b16 %v3210, %v3209
  %v3225 = vpack.c.b16 %v3212, %v3211
  %v3226 = vpack.c.b16 %v3214, %v3213
  %v3227 = vpack.c.b16 %v3216, %v3215
  %v3228 = vpack.c.b16 %v3218, %v3217
  %v3229 = vpack.c.b16 %v3220, %v3219
  %v3230 = vpack.c.b16 %v3222, %v3221
  %3239 = vmatprep.subr.bf16.mxu0 0
  %3240 = vmatpush1.bf16.msra.mxu0 %v3223
  %3241 = vmatprep.subr.bf16.mxu0 0
  %3242 = vmatpush1.bf16.msra.mxu0 %v3224
  %3243 = vmatprep.subr.bf16.mxu0 0
  %3244 = vmatpush1.bf16.msra.mxu0 %v3225
  %3245 = vmatprep.subr.bf16.mxu0 0
  %3246 = vmatpush1.bf16.msra.mxu0 %v3226
  %3247 = vmatprep.subr.bf16.mxu0 0
  %3248 = vmatpush1.bf16.msra.mxu0 %v3227
  %3249 = vmatprep.subr.bf16.mxu0 0
  %3250 = vmatpush1.bf16.msra.mxu0 %v3228
  %3251 = vmatprep.subr.bf16.mxu0 0
  %3252 = vmatpush1.bf16.msra.mxu0 %v3229
  %3253 = vmatprep.subr.bf16.mxu0 0
  %3254 = vmatpush1.bf16.msra.mxu0 %v3230
  %3255 = vmatprep.subr.bf16.mxu0 0
  %3256 = vmatpush1.bf16.msra.mxu0 0
  %3257 = vmatprep.subr.bf16.mxu0 0
  %3258 = vmatpush1.bf16.msra.mxu0 0
  %3259 = vmatprep.subr.bf16.mxu0 0
  %3260 = vmatpush1.bf16.msra.mxu0 0
  %3261 = vmatprep.subr.bf16.mxu0 0
  %3262 = vmatpush1.bf16.msra.mxu0 0
  %3263 = vmatprep.subr.bf16.mxu0 0
  %3264 = vmatpush1.bf16.msra.mxu0 0
  %3265 = vmatprep.subr.bf16.mxu0 0
  %3266 = vmatpush1.bf16.msra.mxu0 0
  %3267 = vmatprep.subr.bf16.mxu0 0
  %3268 = vmatpush1.bf16.msra.mxu0 0
  %3269 = vmatprep.subr.bf16.mxu0 0
  %3270 = vmatpush1.bf16.msra.mxu0 0
  %3271 = vmatprep.mubr.bf16.mxu0 0
  %3272 = vmatmul.mubr.bf16.gmra.mrb[0].mxu0 %v3167
  %v3273 = vpop.f32.mrb[0].mxu0
  %v3274 = vadd.f32 %v3189, %v3273
  %v3275 = vpop.f32.mrb[0].mxu0
  %v3276 = vpop.f32.mrb[0].mxu0
  %v3277 = vpop.f32.mrb[0].mxu0
  %3278 = vdwg.mxu0
  %v3279 = vmax.f32 %v3274, 0.0
  %3280 = vst [vmem:[%s9] sm:$0xff] %v3279
  %v3281 = vrot.slane %v3279, 4
  %v3282 = vmax.f32 %v3279, %v3281
  %v3283 = vrot.slane %v3282, 2
  %v3284 = vmax.f32 %v3282, %v3283
  %v3285 = vrot.slane %v3284, 1
  %v3286 = vmax.f32 %v3284, %v3285
  %v3287 = vld [vmem:[#allocation2] sm:$0x1]
  %v3288 = vmax.f32 %v3287, %v3286
  %v3290 = vlaneseq
  %v3291 = vshrl.u32 %v3290, 7
  %v3292 = vsub.s32 0, %v3291
  %v3293 = vrot.slane %v3288, %v3292
  %v3295 = vsub.f32 %v3279, %v3293
  %v3296 = vmul.f32 %v3295, 1.442695
  %v3297 = vpow.pop %v3296
  %v3298 = vsub.f32 %v3287, %v3288
  %v3299 = vmul.f32 %v3298, 1.442695
  %v3300 = vpow.pop %v3299
  %v3301 = vld [vmem:[#allocation3] sm:$0x1]
  %v3302 = vmul.f32 %v3300, %v3301
  %v3303 = vrot.slane %v3297, 4
  %v3304 = vadd.f32 %v3297, %v3303
  %v3305 = vrot.slane %v3304, 2
  %v3306 = vadd.f32 %v3304, %v3305
  %v3307 = vrot.slane %v3306, 1
  %v3308 = vadd.f32 %v3306, %v3307
  %v3309 = vadd.f32 %v3302, %v3308
  %3310 = vst [vmem:[#allocation3] sm:$0x1] %v3309
  %3311 = vst [vmem:[#allocation2] sm:$0x1] %v3288
  // Predicated region
  $region42: #{mlp_forward.2} parent=0 // pred_check
    %p3312 = pneg %p35
  $region43: #{mlp_forward.2} parent=0 // pred_check_branch
    %3314 = sbr.rel (%p3312) target = $region45
  $region44: #{mlp_forward.2} parent=0 // pred_region
    %v3315 = vld [vmem:[#allocation2] sm:$0x1]
    %3316 = vst [vmem:[%s10] sm:$0x1] %v3315
    %v3317 = vld [vmem:[#allocation3] sm:$0x1]
    %3318 = vst [vmem:[%s10 + $0x1] sm:$0x1] %v3317
  $region45: #{mlp_forward.2} parent=0 // pred_fallthru
    _
  // Predicated region
  $region46: #{mlp_forward.2} parent=0 // pred_check
    _
  $region47: #{mlp_forward.2} parent=0 // pred_check_branch
    %3320 = sbr.rel (0) target = $region49
  $region48: #{mlp_forward.2} parent=0 // pred_region
    _
  $region49: #{mlp_forward.2} parent=0 // pred_fallthru
    _
  // Predicated region
  $region50: #{mlp_forward.2} parent=0 // pred_check
    _
  $region51: #{mlp_forward.2} parent=0 // pred_check_branch
    %3322 = sbr.rel (0) target = $region53
  $region52: #{mlp_forward.2} parent=0 // pred_region
    _
  $region53: #{mlp_forward.2} parent=0 // pred_fallthru
    _
  // Predicated region
  $region54: #{mlp_forward.2} parent=0 // pred_check
    _
  $region55: #{mlp_forward.2} parent=0 // pred_check_branch
    %3324 = sbr.rel (0) target = $region57
  $region56: #{mlp_forward.2} parent=0 // pred_region
    _
  $region57: #{mlp_forward.2} parent=0 // pred_fallthru
    _
  // Predicated region
  $region58: #{mlp_forward.2} parent=0 // pred_check
    _
  $region59: #{mlp_forward.2} parent=0 // pred_check_branch
    %3326 = sbr.rel (0) target = $region61
  $region60: #{mlp_forward.2} parent=0 // pred_region
    _
  $region61: #{mlp_forward.2} parent=0 // pred_fallthru
    _

</llo_original>
